<compile_context>
chip_gen: v7x
topology: tpu7x:2x2x1
jax: 0.10.0
libtpu: 0.0.40
codegen_flags: <defaults>
</compile_context>

<pallas_src>
import functools
import math

import jax
import jax.numpy as jnp
from jax.experimental import pallas as pl
from jax.experimental.pallas import tpu as pltpu


def _layer_norm(x, gamma, beta, eps=1e-5):
    # LayerNorm over last dim (torch.nn.LayerNorm(d_model), eps=1e-5), f32 math.
    mu = jnp.mean(x, axis=-1, keepdims=True)
    var = jnp.mean(jnp.square(x - mu), axis=-1, keepdims=True)
    return (x - mu) * jax.lax.rsqrt(var + eps) * gamma + beta


def transformer_kernel(
    q_ref, k_ref, v_ref,
    wq_ref, bq_ref, wk_ref, bk_ref, wv_ref, bv_ref,
    wo_ref, bo_ref,
    g1_ref, be1_ref, g2_ref, be2_ref,
    wf1_ref, bf1_ref, wf2_ref, bf2_ref,
    out_ref, *rest,
    n_heads, d_keys, d_values, mask_flag, output_attention,
):
    if output_attention:
        attn_ref, kh_scr, vh_scr = rest
    else:
        attn_ref = None
        kh_scr, vh_scr = rest

    # One grid step == (batch element, query tile).  K/V blocks hold the full
    # sequence for that batch element; q/out/attn are tiled over L.
    q = q_ref[0]                       # (TL, Dm)  compute dtype (bf16)
    cdt = q.dtype
    TL = q.shape[0]
    S = k_ref.shape[1]
    H, E, Dv = n_heads, d_keys, d_values

    # --- K / V projections: computed once per batch element, cached in VMEM ---
    # (query-tile axis is "arbitrary" so lt iterations for a batch run in order
    #  on one core; the k/v input blocks are constant over lt so they stay resident.)
    @pl.when(pl.program_id(1) == 0)
    def _():
        k = k_ref[0]                   # (S, Dm)
        v = v_ref[0]                   # (S, Dm)
        K = jnp.dot(k, wk_ref[...], preferred_element_type=jnp.float32) + bk_ref[...]
        V = jnp.dot(v, wv_ref[...], preferred_element_type=jnp.float32) + bv_ref[...]
        kh_scr[...] = K.astype(cdt)    # (S, H*E)
        vh_scr[...] = V.astype(cdt)    # (S, H*Dv)

    # --- Q projection (bf16 inputs, f32 accumulation, f32 bias) ---
    # softmax scale is already folded into wq/bq host-side.
    Q = jnp.dot(q, wq_ref[...], preferred_element_type=jnp.float32) + bq_ref[...]

    Qh = Q.reshape(TL, H, E).astype(cdt)
    Kh = kh_scr[...].reshape(S, H, E)
    Vh = vh_scr[...].reshape(S, H, Dv)

    # batched-over-heads scaled dot-product attention
    scores = jnp.einsum("lhe,she->hls", Qh, Kh,
                        preferred_element_type=jnp.float32)        # (H, TL, S)

    if mask_flag:
        # TriangularCausalMask (attn_mask is None in the module call).
        # NOTE: matches the PyTorch mask only for self-attention (S == L).
        q0 = pl.program_id(1) * TL
        row = q0 + jax.lax.broadcasted_iota(jnp.int32, (TL, S), 0)
        col = jax.lax.broadcasted_iota(jnp.int32, (TL, S), 1)
        scores = jnp.where((col > row)[None, :, :], jnp.float32(-1e30), scores)

    A = jax.nn.softmax(scores, axis=-1)                             # f32 (H, TL, S)

    if attn_ref is not None:
        attn_ref[0] = A.astype(attn_ref.dtype)                      # one slab store

    ctx = jnp.einsum("hls,shd->lhd", A.astype(cdt), Vh,
                     preferred_element_type=jnp.float32)            # (TL, H, Dv)
    ctx = ctx.reshape(TL, H * Dv).astype(cdt)

    # single full-contraction out-projection
    x = jnp.dot(ctx, wo_ref[...], preferred_element_type=jnp.float32) + bo_ref[...]

    # x = x + dropout(x); eval-mode dropout == identity  =>  2 * x
    x = 2.0 * x
    x = _layer_norm(x, g1_ref[...], be1_ref[...])                   # norm1 (f32)

    # FFN: conv1 (1x1, d_model->d_ff) + relu, conv2 (1x1, d_ff->d_model)
    xb = x.astype(cdt)
    y = jnp.dot(xb, wf1_ref[...], preferred_element_type=jnp.float32) + bf1_ref[...]
    y = jnp.maximum(y, 0.0).astype(cdt)
    y = jnp.dot(y, wf2_ref[...], preferred_element_type=jnp.float32) + bf2_ref[...]

    out_ref[0] = _layer_norm(x + y, g2_ref[...], be2_ref[...]).astype(out_ref.dtype)


def _pick_tile_l(L, max_tile=256):
    """Largest query-tile that divides L, is a multiple of 8, and <= max_tile."""
    if L <= max_tile:
        return L
    for t in range(max_tile, 7, -8):
        if L % t == 0:
            return t
    return L  # fallback: no tiling


def transformer_module(queries, keys, values, params, *, n_heads, mask_flag=True,
                       output_attention=True, compute_dtype=jnp.bfloat16,
                       tile_l=None):
    B, L, d_model = queries.shape
    S = keys.shape[1]
    H = n_heads
    d_keys = params["wq"].shape[1] // H
    d_values = params["wv"].shape[1] // H
    scale = 1.0 / math.sqrt(d_keys)

    TILE_L = tile_l if tile_l is not None else _pick_tile_l(L)
    assert L % TILE_L == 0

    cdt = compute_dtype
    f32 = jnp.float32

    # Host-side prep: fold the softmax scale into the Q projection; cast matmul
    # weights and activations to the compute dtype (biases / LN params stay f32).
    wq = (params["wq"] * scale).astype(cdt)
    bq = (params["bq"] * scale).astype(f32)
    wk, bk = params["wk"].astype(cdt), params["bk"].astype(f32)
    wv, bv = params["wv"].astype(cdt), params["bv"].astype(f32)
    wo, bo = params["wo"].astype(cdt), params["bo"].astype(f32)
    g1, be1 = params["g1"].astype(f32), params["be1"].astype(f32)
    g2, be2 = params["g2"].astype(f32), params["be2"].astype(f32)
    wf1, bf1 = params["wf1"].astype(cdt), params["bf1"].astype(f32)
    wf2, bf2 = params["wf2"].astype(cdt), params["bf2"].astype(f32)

    weights = [wq, bq, wk, bk, wv, bv, wo, bo,
               g1, be1, g2, be2, wf1, bf1, wf2, bf2]

    qc = queries.astype(cdt)
    kc = keys.astype(cdt)
    vc = values.astype(cdt)

    def full_spec(arr):
        nd = arr.ndim
        return pl.BlockSpec(arr.shape, lambda b, lt, _nd=nd: (0,) * _nd)

    in_specs = [
        pl.BlockSpec((1, TILE_L, d_model), lambda b, lt: (b, lt, 0)),   # q tile
        pl.BlockSpec((1, S, d_model), lambda b, lt: (b, 0, 0)),         # k full
        pl.BlockSpec((1, S, d_model), lambda b, lt: (b, 0, 0)),         # v full
    ] + [full_spec(w) for w in weights]

    out_shapes = [jax.ShapeDtypeStruct((B, L, d_model), jnp.float32)]
    out_specs = [pl.BlockSpec((1, TILE_L, d_model), lambda b, lt: (b, lt, 0))]
    if output_attention:
        out_shapes.append(jax.ShapeDtypeStruct((B, H, L, S), jnp.float32))
        out_specs.append(pl.BlockSpec((1, H, TILE_L, S), lambda b, lt: (b, 0, lt, 0)))

    kernel = functools.partial(
        transformer_kernel,
        n_heads=H, d_keys=d_keys, d_values=d_values, mask_flag=mask_flag,
        output_attention=output_attention,
    )

    results = pl.pallas_call(
        kernel,
        out_shape=tuple(out_shapes),
        grid_spec=pltpu.PrefetchScalarGridSpec(
            num_scalar_prefetch=0,
            grid=(B, L // TILE_L),
            in_specs=in_specs,
            out_specs=out_specs,
            scratch_shapes=[
                pltpu.VMEM((S, H * d_keys), cdt),     # cached K projection
                pltpu.VMEM((S, H * d_values), cdt),   # cached V projection
            ],
        ),
        compiler_params=pltpu.CompilerParams(
            # batch axis megacore-sharded; query-tile axis sequential so the
            # cached K/V projections in scratch are valid across tiles.
            dimension_semantics=("parallel", "arbitrary"),
            vmem_limit_bytes=48 * 1024 * 1024,   # fits v7x's 64 MiB VMEM with headroom
        ),
    )(qc, kc, vc, *weights)

    if output_attention:
        return results[0], results[1]
    return results[0], None


def init_params(key, d_model, n_heads, d_ff, d_keys=None, d_values=None):
    """Deterministic synthetic parameter init (shapes match the nn.Module)."""
    d_keys = d_keys or d_model // n_heads
    d_values = d_values or d_model // n_heads
    ks = jax.random.split(key, 8)
    s = 0.1

    def r(k, shape):
        return s * jax.random.normal(k, shape, jnp.float32)

    params = {
        # attention projections (stored as (in, out) so kernel does x @ W)
        "wq": r(ks[0], (d_model, n_heads * d_keys)),
        "bq": jnp.zeros((1, n_heads * d_keys), jnp.float32),
        "wk": r(ks[1], (d_model, n_heads * d_keys)),
        "bk": jnp.zeros((1, n_heads * d_keys), jnp.float32),
        "wv": r(ks[2], (d_model, n_heads * d_values)),
        "bv": jnp.zeros((1, n_heads * d_values), jnp.float32),
        "wo": r(ks[3], (n_heads * d_values, d_model)),
        "bo": jnp.zeros((1, d_model), jnp.float32),
        # layernorms
        "g1": jnp.ones((1, d_model), jnp.float32),
        "be1": jnp.zeros((1, d_model), jnp.float32),
        "g2": jnp.ones((1, d_model), jnp.float32),
        "be2": jnp.zeros((1, d_model), jnp.float32),
        # 1x1 "conv" FFN weights (conv1: d_model->d_ff, conv2: d_ff->d_model)
        "wf1": r(ks[4], (d_model, d_ff)),
        "bf1": r(ks[5], (1, d_ff)),
        "wf2": r(ks[6], (d_ff, d_model)),
        "bf2": r(ks[7], (1, d_model)),
    }
    return params


if __name__ == "__main__":
    # TODO(synk): train-mode nn.Dropout (stochastic masking) not implemented; the
    # module is evaluated in eval mode where dropout is the identity.
    B, L, d_model, n_heads, d_ff = 2, 8, 32, 4, 64

    key = jax.random.PRNGKey(0)
    kq, kk, kv, kp = jax.random.split(key, 4)
    queries = jax.random.normal(kq, (B, L, d_model), jnp.float32)
    keys = jax.random.normal(kk, (B, L, d_model), jnp.float32)
    values = jax.random.normal(kv, (B, L, d_model), jnp.float32)
    params = init_params(kp, d_model, n_heads, d_ff)

    out, attn = transformer_module(queries, keys, values, params,
                                   n_heads=n_heads, mask_flag=True,
                                   output_attention=True)
    jax.block_until_ready((out, attn))

    assert out.shape == (B, L, d_model)
    assert attn.shape == (B, n_heads, L, L)
    assert bool(jnp.all(jnp.isfinite(out)))
    assert bool(jnp.all(jnp.isfinite(attn)))
    print("KERNEL_OK")
</pallas_src>

<mosaic_0001>
module attributes {stable_mosaic.version = 11 : i64} {
  func.func @transformer_kernel(%arg0: i32, %arg1: i32, %arg2: memref<1x8x32xbf16, #tpu.memory_space<vmem>>, %arg3: memref<1x8x32xbf16, #tpu.memory_space<vmem>>, %arg4: memref<1x8x32xbf16, #tpu.memory_space<vmem>>, %arg5: memref<32x32xbf16, #tpu.memory_space<vmem>>, %arg6: memref<1x32xf32, #tpu.memory_space<vmem>>, %arg7: memref<32x32xbf16, #tpu.memory_space<vmem>>, %arg8: memref<1x32xf32, #tpu.memory_space<vmem>>, %arg9: memref<32x32xbf16, #tpu.memory_space<vmem>>, %arg10: memref<1x32xf32, #tpu.memory_space<vmem>>, %arg11: memref<32x32xbf16, #tpu.memory_space<vmem>>, %arg12: memref<1x32xf32, #tpu.memory_space<vmem>>, %arg13: memref<1x32xf32, #tpu.memory_space<vmem>>, %arg14: memref<1x32xf32, #tpu.memory_space<vmem>>, %arg15: memref<1x32xf32, #tpu.memory_space<vmem>>, %arg16: memref<1x32xf32, #tpu.memory_space<vmem>>, %arg17: memref<32x64xbf16, #tpu.memory_space<vmem>>, %arg18: memref<1x64xf32, #tpu.memory_space<vmem>>, %arg19: memref<64x32xbf16, #tpu.memory_space<vmem>>, %arg20: memref<1x32xf32, #tpu.memory_space<vmem>>, %arg21: memref<1x8x32xf32, #tpu.memory_space<vmem>>, %arg22: memref<1x4x8x8xf32, #tpu.memory_space<vmem>>, %arg23: memref<8x32xbf16, #tpu.memory_space<vmem>>, %arg24: memref<8x32xbf16, #tpu.memory_space<vmem>>) attributes {dimension_semantics = [#tpu.dimension_semantics<parallel>, #tpu.dimension_semantics<arbitrary>], iteration_bounds = array<i64: 2, 1>, scalar_prefetch = 0 : i64, scratch_operands = 2 : i64, tpu.core_type = #tpu.core_type<tc>, window_params = [{transform_indices = @transform_0, window_bounds = array<i64: 1, 8, 32>}, {transform_indices = @transform_1, window_bounds = array<i64: 1, 8, 32>}, {transform_indices = @transform_2, window_bounds = array<i64: 1, 8, 32>}, {pipeline_mode = #tpu.pipeline_mode<synchronous>, transform_indices = @transform_3, window_bounds = array<i64: 32, 32>}, {pipeline_mode = #tpu.pipeline_mode<synchronous>, transform_indices = @transform_4, window_bounds = array<i64: 1, 32>}, {pipeline_mode = #tpu.pipeline_mode<synchronous>, transform_indices = @transform_5, window_bounds = array<i64: 32, 32>}, {pipeline_mode = #tpu.pipeline_mode<synchronous>, transform_indices = @transform_6, window_bounds = array<i64: 1, 32>}, {pipeline_mode = #tpu.pipeline_mode<synchronous>, transform_indices = @transform_7, window_bounds = array<i64: 32, 32>}, {pipeline_mode = #tpu.pipeline_mode<synchronous>, transform_indices = @transform_8, window_bounds = array<i64: 1, 32>}, {pipeline_mode = #tpu.pipeline_mode<synchronous>, transform_indices = @transform_9, window_bounds = array<i64: 32, 32>}, {pipeline_mode = #tpu.pipeline_mode<synchronous>, transform_indices = @transform_10, window_bounds = array<i64: 1, 32>}, {pipeline_mode = #tpu.pipeline_mode<synchronous>, transform_indices = @transform_11, window_bounds = array<i64: 1, 32>}, {pipeline_mode = #tpu.pipeline_mode<synchronous>, transform_indices = @transform_12, window_bounds = array<i64: 1, 32>}, {pipeline_mode = #tpu.pipeline_mode<synchronous>, transform_indices = @transform_13, window_bounds = array<i64: 1, 32>}, {pipeline_mode = #tpu.pipeline_mode<synchronous>, transform_indices = @transform_14, window_bounds = array<i64: 1, 32>}, {pipeline_mode = #tpu.pipeline_mode<synchronous>, transform_indices = @transform_15, window_bounds = array<i64: 32, 64>}, {pipeline_mode = #tpu.pipeline_mode<synchronous>, transform_indices = @transform_16, window_bounds = array<i64: 1, 64>}, {pipeline_mode = #tpu.pipeline_mode<synchronous>, transform_indices = @transform_17, window_bounds = array<i64: 64, 32>}, {pipeline_mode = #tpu.pipeline_mode<synchronous>, transform_indices = @transform_18, window_bounds = array<i64: 1, 32>}, {transform_indices = @transform_19, window_bounds = array<i64: 1, 8, 32>}, {transform_indices = @transform_20, window_bounds = array<i64: 1, 4, 8, 8>}]} {
    %c0 = arith.constant 0 : index
    %c0_0 = arith.constant 0 : index
    %c0_1 = arith.constant 0 : index
    %0 = vector.load %arg2[%c0, %c0_0, %c0_1] : memref<1x8x32xbf16, #tpu.memory_space<vmem>>, vector<1x8x32xbf16>
    %1 = vector.shape_cast %0 : vector<1x8x32xbf16> to vector<8x32xbf16>
    %c0_i32 = arith.constant 0 : i32
    %2 = arith.cmpi eq, %arg1, %c0_i32 : i32
    %3 = arith.extui %2 : i1 to i32
    %c0_i32_2 = arith.constant 0 : i32
    %4 = arith.cmpi ne, %3, %c0_i32_2 : i32
    scf.if %4 {
      %c0_59 = arith.constant 0 : index
      %c0_60 = arith.constant 0 : index
      %c0_61 = arith.constant 0 : index
      %120 = vector.load %arg3[%c0_59, %c0_60, %c0_61] : memref<1x8x32xbf16, #tpu.memory_space<vmem>>, vector<1x8x32xbf16>
      %121 = vector.shape_cast %120 : vector<1x8x32xbf16> to vector<8x32xbf16>
      %c0_62 = arith.constant 0 : index
      %c0_63 = arith.constant 0 : index
      %c0_64 = arith.constant 0 : index
      %122 = vector.load %arg4[%c0_62, %c0_63, %c0_64] : memref<1x8x32xbf16, #tpu.memory_space<vmem>>, vector<1x8x32xbf16>
      %123 = vector.shape_cast %122 : vector<1x8x32xbf16> to vector<8x32xbf16>
      %c0_65 = arith.constant 0 : index
      %c0_66 = arith.constant 0 : index
      %124 = vector.load %arg7[%c0_65, %c0_66] : memref<32x32xbf16, #tpu.memory_space<vmem>>, vector<32x32xbf16>
      %cst_67 = arith.constant dense<0.000000e+00> : vector<8x32xf32>
      %125 = tpu.matmul %121, %124, %cst_67 {dimension_numbers = #tpu.dot_dimension_numbers<[1], [0], [0], [1], [0, 0, 1, 1], [], []>} : vector<8x32xbf16>, vector<32x32xbf16>, vector<8x32xf32> -> vector<8x32xf32>
      %c0_68 = arith.constant 0 : index
      %c0_69 = arith.constant 0 : index
      %126 = vector.load %arg8[%c0_68, %c0_69] : memref<1x32xf32, #tpu.memory_space<vmem>>, vector<1x32xf32>
      %127 = vector.broadcast %126 : vector<1x32xf32> to vector<8x32xf32>
      %128 = arith.addf %125, %127 : vector<8x32xf32>
      %c0_70 = arith.constant 0 : index
      %c0_71 = arith.constant 0 : index
      %129 = vector.load %arg9[%c0_70, %c0_71] : memref<32x32xbf16, #tpu.memory_space<vmem>>, vector<32x32xbf16>
      %cst_72 = arith.constant dense<0.000000e+00> : vector<8x32xf32>
      %130 = tpu.matmul %123, %129, %cst_72 {dimension_numbers = #tpu.dot_dimension_numbers<[1], [0], [0], [1], [0, 0, 1, 1], [], []>} : vector<8x32xbf16>, vector<32x32xbf16>, vector<8x32xf32> -> vector<8x32xf32>
      %c0_73 = arith.constant 0 : index
      %c0_74 = arith.constant 0 : index
      %131 = vector.load %arg10[%c0_73, %c0_74] : memref<1x32xf32, #tpu.memory_space<vmem>>, vector<1x32xf32>
      %132 = vector.broadcast %131 : vector<1x32xf32> to vector<8x32xf32>
      %133 = arith.addf %130, %132 : vector<8x32xf32>
      %134 = arith.truncf %128 : vector<8x32xf32> to vector<8x32xbf16>
      %c0_75 = arith.constant 0 : index
      %c0_76 = arith.constant 0 : index
      %135 = vector.load %arg23[%c0_75, %c0_76] : memref<8x32xbf16, #tpu.memory_space<vmem>>, vector<8x32xbf16>
      tpu.vector_store %arg23[%c0_75, %c0_76], %134 {strides = array<i32>} : memref<8x32xbf16, #tpu.memory_space<vmem>>, vector<8x32xbf16>,
      %136 = arith.truncf %133 : vector<8x32xf32> to vector<8x32xbf16>
      %c0_77 = arith.constant 0 : index
      %c0_78 = arith.constant 0 : index
      %137 = vector.load %arg24[%c0_77, %c0_78] : memref<8x32xbf16, #tpu.memory_space<vmem>>, vector<8x32xbf16>
      tpu.vector_store %arg24[%c0_77, %c0_78], %136 {strides = array<i32>} : memref<8x32xbf16, #tpu.memory_space<vmem>>, vector<8x32xbf16>,
    } else {
    }
    %c0_3 = arith.constant 0 : index
    %c0_4 = arith.constant 0 : index
    %5 = vector.load %arg5[%c0_3, %c0_4] : memref<32x32xbf16, #tpu.memory_space<vmem>>, vector<32x32xbf16>
    %cst = arith.constant dense<0.000000e+00> : vector<8x32xf32>
    %6 = tpu.matmul %1, %5, %cst {dimension_numbers = #tpu.dot_dimension_numbers<[1], [0], [0], [1], [0, 0, 1, 1], [], []>} : vector<8x32xbf16>, vector<32x32xbf16>, vector<8x32xf32> -> vector<8x32xf32>
    %c0_5 = arith.constant 0 : index
    %c0_6 = arith.constant 0 : index
    %7 = vector.load %arg6[%c0_5, %c0_6] : memref<1x32xf32, #tpu.memory_space<vmem>>, vector<1x32xf32>
    %8 = vector.broadcast %7 : vector<1x32xf32> to vector<8x32xf32>
    %9 = arith.addf %6, %8 : vector<8x32xf32>
    %10 = vector.shape_cast %9 : vector<8x32xf32> to vector<8x4x8xf32>
    %11 = arith.truncf %10 : vector<8x4x8xf32> to vector<8x4x8xbf16>
    %c0_7 = arith.constant 0 : index
    %c0_8 = arith.constant 0 : index
    %12 = vector.load %arg23[%c0_7, %c0_8] : memref<8x32xbf16, #tpu.memory_space<vmem>>, vector<8x32xbf16>
    %13 = vector.shape_cast %12 : vector<8x32xbf16> to vector<8x4x8xbf16>
    %c0_9 = arith.constant 0 : index
    %c0_10 = arith.constant 0 : index
    %14 = vector.load %arg24[%c0_9, %c0_10] : memref<8x32xbf16, #tpu.memory_space<vmem>>, vector<8x32xbf16>
    %15 = vector.shape_cast %14 : vector<8x32xbf16> to vector<8x4x8xbf16>
    "tpu.trace_start"() <{level = 10 : i32, message = "lhe,she->hls"}> : () -> ()
    %cst_11 = arith.constant dense<0.000000e+00> : vector<4x8x8xf32>
    %16 = tpu.matmul %11, %13, %cst_11 {dimension_numbers = #tpu.dot_dimension_numbers<[2], [2], [0], [0], [0, 1, 0, 0, 1, 0], [1], [1]>} : vector<8x4x8xbf16>, vector<8x4x8xbf16>, vector<4x8x8xf32> -> vector<4x8x8xf32>
    "tpu.trace_stop"() : () -> ()
    %c8_i32 = arith.constant 8 : i32
    %17 = arith.muli %arg1, %c8_i32 : i32
    %18 = tpu.iota {dimensions = array<i32: 0>} : vector<8x8xi32>
    %19 = vector.broadcast %17 : i32 to vector<8x8xi32>
    %20 = arith.addi %19, %18 : vector<8x8xi32>
    %21 = tpu.iota {dimensions = array<i32: 1>} : vector<8x8xi32>
    %22 = arith.cmpi sgt, %21, %20 : vector<8x8xi32>
    %23 = vector.shape_cast %22 : vector<8x8xi1> to vector<1x8x8xi1>
    %cst_12 = arith.constant -1.000000e+30 : f32
    %24 = vector.shape_cast %23 : vector<1x8x8xi1> to vector<1x8x8xi1>
    %25 = vector.broadcast %24 : vector<1x8x8xi1> to vector<4x8x8xi1>
    %26 = vector.broadcast %cst_12 : f32 to vector<4x8x8xf32>
    %27 = arith.select %25, %26, %16 : vector<4x8x8xi1>, vector<4x8x8xf32>
    %cst_13 = arith.constant dense<0xFF800000> : vector<4x8xf32>
    %28 = vector.multi_reduction <maximumf>, %27, %cst_13 [2] : vector<4x8x8xf32> to vector<4x8xf32>
    %cst_14 = arith.constant 0xFF800000 : f32
    %29 = vector.broadcast %cst_14 : f32 to vector<4x8xf32>
    %30 = arith.maximumf %29, %28 : vector<4x8xf32>
    %31 = vector.shape_cast %30 : vector<4x8xf32> to vector<4x8x1xf32>
    %32 = vector.broadcast %31 : vector<4x8x1xf32> to vector<4x8x8xf32>
    %33 = arith.subf %27, %32 : vector<4x8x8xf32>
    %34 = math.exp %33 : vector<4x8x8xf32>
    %cst_15 = arith.constant dense<0.000000e+00> : vector<4x8xf32>
    %35 = vector.multi_reduction <add>, %34, %cst_15 [2] : vector<4x8x8xf32> to vector<4x8xf32>
    %36 = vector.shape_cast %35 : vector<4x8xf32> to vector<4x8x1xf32>
    %37 = vector.broadcast %36 : vector<4x8x1xf32> to vector<4x8x8xf32>
    %38 = arith.divf %34, %37 : vector<4x8x8xf32>
    %c0_16 = arith.constant 0 : index
    %c0_17 = arith.constant 0 : index
    %c0_18 = arith.constant 0 : index
    %c0_19 = arith.constant 0 : index
    %39 = vector.load %arg22[%c0_16, %c0_17, %c0_18, %c0_19] : memref<1x4x8x8xf32, #tpu.memory_space<vmem>>, vector<1x4x8x8xf32>
    %40 = vector.shape_cast %39 : vector<1x4x8x8xf32> to vector<4x8x8xf32>
    %41 = vector.shape_cast %38 : vector<4x8x8xf32> to vector<1x4x8x8xf32>
    tpu.vector_store %arg22[%c0_16, %c0_17, %c0_18, %c0_19], %41 {strides = array<i32>} : memref<1x4x8x8xf32, #tpu.memory_space<vmem>>, vector<1x4x8x8xf32>,
    %42 = arith.truncf %38 : vector<4x8x8xf32> to vector<4x8x8xbf16>
    "tpu.trace_start"() <{level = 10 : i32, message = "hls,shd->lhd"}> : () -> ()
    %cst_20 = arith.constant dense<0.000000e+00> : vector<4x8x8xf32>
    %43 = tpu.matmul %15, %42, %cst_20 {dimension_numbers = #tpu.dot_dimension_numbers<[0], [2], [2], [1], [0, 1, 0, 2, 1, 1], [1], [0]>} : vector<8x4x8xbf16>, vector<4x8x8xbf16>, vector<4x8x8xf32> -> vector<4x8x8xf32>
    %44 = tpu.transpose %43, [2, 0, 1] : vector<4x8x8xf32> -> vector<8x4x8xf32>
    "tpu.trace_stop"() : () -> ()
    %45 = vector.shape_cast %44 : vector<8x4x8xf32> to vector<8x32xf32>
    %46 = arith.truncf %45 : vector<8x32xf32> to vector<8x32xbf16>
    %c0_21 = arith.constant 0 : index
    %c0_22 = arith.constant 0 : index
    %47 = vector.load %arg11[%c0_21, %c0_22] : memref<32x32xbf16, #tpu.memory_space<vmem>>, vector<32x32xbf16>
    %cst_23 = arith.constant dense<0.000000e+00> : vector<8x32xf32>
    %48 = tpu.matmul %46, %47, %cst_23 {dimension_numbers = #tpu.dot_dimension_numbers<[1], [0], [0], [1], [0, 0, 1, 1], [], []>} : vector<8x32xbf16>, vector<32x32xbf16>, vector<8x32xf32> -> vector<8x32xf32>
    %c0_24 = arith.constant 0 : index
    %c0_25 = arith.constant 0 : index
    %49 = vector.load %arg12[%c0_24, %c0_25] : memref<1x32xf32, #tpu.memory_space<vmem>>, vector<1x32xf32>
    %50 = vector.broadcast %49 : vector<1x32xf32> to vector<8x32xf32>
    %51 = arith.addf %48, %50 : vector<8x32xf32>
    %cst_26 = arith.constant 2.000000e+00 : f32
    %52 = vector.broadcast %cst_26 : f32 to vector<8x32xf32>
    %53 = arith.mulf %52, %51 : vector<8x32xf32>
    %c0_27 = arith.constant 0 : index
    %c0_28 = arith.constant 0 : index
    %54 = vector.load %arg13[%c0_27, %c0_28] : memref<1x32xf32, #tpu.memory_space<vmem>>, vector<1x32xf32>
    %c0_29 = arith.constant 0 : index
    %c0_30 = arith.constant 0 : index
    %55 = vector.load %arg14[%c0_29, %c0_30] : memref<1x32xf32, #tpu.memory_space<vmem>>, vector<1x32xf32>
    %cst_31 = arith.constant dense<0.000000e+00> : vector<8xf32>
    %56 = vector.multi_reduction <add>, %53, %cst_31 [1] : vector<8x32xf32> to vector<8xf32>
    %57 = vector.shape_cast %56 : vector<8xf32> to vector<8x1xf32>
    %cst_32 = arith.constant 3.200000e+01 : f32
    %58 = vector.broadcast %cst_32 : f32 to vector<8x1xf32>
    %59 = arith.divf %57, %58 : vector<8x1xf32>
    %60 = vector.broadcast %59 : vector<8x1xf32> to vector<8x32xf32>
    %61 = arith.subf %53, %60 : vector<8x32xf32>
    %62 = arith.mulf %61, %61 : vector<8x32xf32>
    %cst_33 = arith.constant dense<0.000000e+00> : vector<8xf32>
    %63 = vector.multi_reduction <add>, %62, %cst_33 [1] : vector<8x32xf32> to vector<8xf32>
    %64 = vector.shape_cast %63 : vector<8xf32> to vector<8x1xf32>
    %cst_34 = arith.constant 3.200000e+01 : f32
    %65 = vector.broadcast %cst_34 : f32 to vector<8x1xf32>
    %66 = arith.divf %64, %65 : vector<8x1xf32>
    %67 = vector.broadcast %59 : vector<8x1xf32> to vector<8x32xf32>
    %68 = arith.subf %53, %67 : vector<8x32xf32>
    %cst_35 = arith.constant 9.99999974E-6 : f32
    %69 = vector.broadcast %cst_35 : f32 to vector<8x1xf32>
    %70 = arith.addf %66, %69 : vector<8x1xf32>
    %71 = math.rsqrt %70 : vector<8x1xf32>
    %72 = vector.broadcast %71 : vector<8x1xf32> to vector<8x32xf32>
    %73 = arith.mulf %68, %72 : vector<8x32xf32>
    %74 = vector.broadcast %54 : vector<1x32xf32> to vector<8x32xf32>
    %75 = arith.mulf %73, %74 : vector<8x32xf32>
    %76 = vector.broadcast %55 : vector<1x32xf32> to vector<8x32xf32>
    %77 = arith.addf %75, %76 : vector<8x32xf32>
    %78 = arith.truncf %77 : vector<8x32xf32> to vector<8x32xbf16>
    %c0_36 = arith.constant 0 : index
    %c0_37 = arith.constant 0 : index
    %79 = vector.load %arg17[%c0_36, %c0_37] : memref<32x64xbf16, #tpu.memory_space<vmem>>, vector<32x64xbf16>
    %cst_38 = arith.constant dense<0.000000e+00> : vector<8x64xf32>
    %80 = tpu.matmul %78, %79, %cst_38 {dimension_numbers = #tpu.dot_dimension_numbers<[1], [0], [0], [1], [0, 0, 1, 1], [], []>} : vector<8x32xbf16>, vector<32x64xbf16>, vector<8x64xf32> -> vector<8x64xf32>
    %c0_39 = arith.constant 0 : index
    %c0_40 = arith.constant 0 : index
    %81 = vector.load %arg18[%c0_39, %c0_40] : memref<1x64xf32, #tpu.memory_space<vmem>>, vector<1x64xf32>
    %82 = vector.broadcast %81 : vector<1x64xf32> to vector<8x64xf32>
    %83 = arith.addf %80, %82 : vector<8x64xf32>
    %cst_41 = arith.constant 0.000000e+00 : f32
    %84 = vector.broadcast %cst_41 : f32 to vector<8x64xf32>
    %85 = arith.maximumf %83, %84 : vector<8x64xf32>
    %86 = arith.truncf %85 : vector<8x64xf32> to vector<8x64xbf16>
    %c0_42 = arith.constant 0 : index
    %c0_43 = arith.constant 0 : index
    %87 = vector.load %arg19[%c0_42, %c0_43] : memref<64x32xbf16, #tpu.memory_space<vmem>>, vector<64x32xbf16>
    %cst_44 = arith.constant dense<0.000000e+00> : vector<8x32xf32>
    %88 = tpu.matmul %86, %87, %cst_44 {dimension_numbers = #tpu.dot_dimension_numbers<[1], [0], [0], [1], [0, 0, 1, 1], [], []>} : vector<8x64xbf16>, vector<64x32xbf16>, vector<8x32xf32> -> vector<8x32xf32>
    %c0_45 = arith.constant 0 : index
    %c0_46 = arith.constant 0 : index
    %89 = vector.load %arg20[%c0_45, %c0_46] : memref<1x32xf32, #tpu.memory_space<vmem>>, vector<1x32xf32>
    %90 = vector.broadcast %89 : vector<1x32xf32> to vector<8x32xf32>
    %91 = arith.addf %88, %90 : vector<8x32xf32>
    %92 = arith.addf %77, %91 : vector<8x32xf32>
    %c0_47 = arith.constant 0 : index
    %c0_48 = arith.constant 0 : index
    %93 = vector.load %arg15[%c0_47, %c0_48] : memref<1x32xf32, #tpu.memory_space<vmem>>, vector<1x32xf32>
    %c0_49 = arith.constant 0 : index
    %c0_50 = arith.constant 0 : index
    %94 = vector.load %arg16[%c0_49, %c0_50] : memref<1x32xf32, #tpu.memory_space<vmem>>, vector<1x32xf32>
    %cst_51 = arith.constant dense<0.000000e+00> : vector<8xf32>
    %95 = vector.multi_reduction <add>, %92, %cst_51 [1] : vector<8x32xf32> to vector<8xf32>
    %96 = vector.shape_cast %95 : vector<8xf32> to vector<8x1xf32>
    %cst_52 = arith.constant 3.200000e+01 : f32
    %97 = vector.broadcast %cst_52 : f32 to vector<8x1xf32>
    %98 = arith.divf %96, %97 : vector<8x1xf32>
    %99 = vector.broadcast %98 : vector<8x1xf32> to vector<8x32xf32>
    %100 = arith.subf %92, %99 : vector<8x32xf32>
    %101 = arith.mulf %100, %100 : vector<8x32xf32>
    %cst_53 = arith.constant dense<0.000000e+00> : vector<8xf32>
    %102 = vector.multi_reduction <add>, %101, %cst_53 [1] : vector<8x32xf32> to vector<8xf32>
    %103 = vector.shape_cast %102 : vector<8xf32> to vector<8x1xf32>
    %cst_54 = arith.constant 3.200000e+01 : f32
    %104 = vector.broadcast %cst_54 : f32 to vector<8x1xf32>
    %105 = arith.divf %103, %104 : vector<8x1xf32>
    %106 = vector.broadcast %98 : vector<8x1xf32> to vector<8x32xf32>
    %107 = arith.subf %92, %106 : vector<8x32xf32>
    %cst_55 = arith.constant 9.99999974E-6 : f32
    %108 = vector.broadcast %cst_55 : f32 to vector<8x1xf32>
    %109 = arith.addf %105, %108 : vector<8x1xf32>
    %110 = math.rsqrt %109 : vector<8x1xf32>
    %111 = vector.broadcast %110 : vector<8x1xf32> to vector<8x32xf32>
    %112 = arith.mulf %107, %111 : vector<8x32xf32>
    %113 = vector.broadcast %93 : vector<1x32xf32> to vector<8x32xf32>
    %114 = arith.mulf %112, %113 : vector<8x32xf32>
    %115 = vector.broadcast %94 : vector<1x32xf32> to vector<8x32xf32>
    %116 = arith.addf %114, %115 : vector<8x32xf32>
    %c0_56 = arith.constant 0 : index
    %c0_57 = arith.constant 0 : index
    %c0_58 = arith.constant 0 : index
    %117 = vector.load %arg21[%c0_56, %c0_57, %c0_58] : memref<1x8x32xf32, #tpu.memory_space<vmem>>, vector<1x8x32xf32>
    %118 = vector.shape_cast %117 : vector<1x8x32xf32> to vector<8x32xf32>
    %119 = vector.shape_cast %116 : vector<8x32xf32> to vector<1x8x32xf32>
    tpu.vector_store %arg21[%c0_56, %c0_57, %c0_58], %119 {strides = array<i32>} : memref<1x8x32xf32, #tpu.memory_space<vmem>>, vector<1x8x32xf32>,
    return
  }
  func.func @transform_0(%arg0: i32, %arg1: i32) -> (i32, i32, i32) {
    %c0_i32 = arith.constant 0 : i32
    %c0_i32_0 = arith.constant 0 : i32
    return %arg0, %arg1, %c0_i32 : i32, i32, i32
  }
  func.func @transform_1(%arg0: i32, %arg1: i32) -> (i32, i32, i32) {
    %c0_i32 = arith.constant 0 : i32
    %c0_i32_0 = arith.constant 0 : i32
    %c0_i32_1 = arith.constant 0 : i32
    return %arg0, %c0_i32, %c0_i32_0 : i32, i32, i32
  }
  func.func @transform_2(%arg0: i32, %arg1: i32) -> (i32, i32, i32) {
    %c0_i32 = arith.constant 0 : i32
    %c0_i32_0 = arith.constant 0 : i32
    %c0_i32_1 = arith.constant 0 : i32
    return %arg0, %c0_i32, %c0_i32_0 : i32, i32, i32
  }
  func.func @transform_3(%arg0: i32, %arg1: i32) -> (i32, i32) {
    %c0_i32 = arith.constant 0 : i32
    %c0_i32_0 = arith.constant 0 : i32
    %c0_i32_1 = arith.constant 0 : i32
    return %c0_i32, %c0_i32_0 : i32, i32
  }
  func.func @transform_4(%arg0: i32, %arg1: i32) -> (i32, i32) {
    %c0_i32 = arith.constant 0 : i32
    %c0_i32_0 = arith.constant 0 : i32
    %c0_i32_1 = arith.constant 0 : i32
    return %c0_i32, %c0_i32_0 : i32, i32
  }
  func.func @transform_5(%arg0: i32, %arg1: i32) -> (i32, i32) {
    %c0_i32 = arith.constant 0 : i32
    %c0_i32_0 = arith.constant 0 : i32
    %c0_i32_1 = arith.constant 0 : i32
    return %c0_i32, %c0_i32_0 : i32, i32
  }
  func.func @transform_6(%arg0: i32, %arg1: i32) -> (i32, i32) {
    %c0_i32 = arith.constant 0 : i32
    %c0_i32_0 = arith.constant 0 : i32
    %c0_i32_1 = arith.constant 0 : i32
    return %c0_i32, %c0_i32_0 : i32, i32
  }
  func.func @transform_7(%arg0: i32, %arg1: i32) -> (i32, i32) {
    %c0_i32 = arith.constant 0 : i32
    %c0_i32_0 = arith.constant 0 : i32
    %c0_i32_1 = arith.constant 0 : i32
    return %c0_i32, %c0_i32_0 : i32, i32
  }
  func.func @transform_8(%arg0: i32, %arg1: i32) -> (i32, i32) {
    %c0_i32 = arith.constant 0 : i32
    %c0_i32_0 = arith.constant 0 : i32
    %c0_i32_1 = arith.constant 0 : i32
    return %c0_i32, %c0_i32_0 : i32, i32
  }
  func.func @transform_9(%arg0: i32, %arg1: i32) -> (i32, i32) {
    %c0_i32 = arith.constant 0 : i32
    %c0_i32_0 = arith.constant 0 : i32
    %c0_i32_1 = arith.constant 0 : i32
    return %c0_i32, %c0_i32_0 : i32, i32
  }
  func.func @transform_10(%arg0: i32, %arg1: i32) -> (i32, i32) {
    %c0_i32 = arith.constant 0 : i32
    %c0_i32_0 = arith.constant 0 : i32
    %c0_i32_1 = arith.constant 0 : i32
    return %c0_i32, %c0_i32_0 : i32, i32
  }
  func.func @transform_11(%arg0: i32, %arg1: i32) -> (i32, i32) {
    %c0_i32 = arith.constant 0 : i32
    %c0_i32_0 = arith.constant 0 : i32
    %c0_i32_1 = arith.constant 0 : i32
    return %c0_i32, %c0_i32_0 : i32, i32
  }
  func.func @transform_12(%arg0: i32, %arg1: i32) -> (i32, i32) {
    %c0_i32 = arith.constant 0 : i32
    %c0_i32_0 = arith.constant 0 : i32
    %c0_i32_1 = arith.constant 0 : i32
    return %c0_i32, %c0_i32_0 : i32, i32
  }
  func.func @transform_13(%arg0: i32, %arg1: i32) -> (i32, i32) {
    %c0_i32 = arith.constant 0 : i32
    %c0_i32_0 = arith.constant 0 : i32
    %c0_i32_1 = arith.constant 0 : i32
    return %c0_i32, %c0_i32_0 : i32, i32
  }
  func.func @transform_14(%arg0: i32, %arg1: i32) -> (i32, i32) {
    %c0_i32 = arith.constant 0 : i32
    %c0_i32_0 = arith.constant 0 : i32
    %c0_i32_1 = arith.constant 0 : i32
    return %c0_i32, %c0_i32_0 : i32, i32
  }
  func.func @transform_15(%arg0: i32, %arg1: i32) -> (i32, i32) {
    %c0_i32 = arith.constant 0 : i32
    %c0_i32_0 = arith.constant 0 : i32
    %c0_i32_1 = arith.constant 0 : i32
    return %c0_i32, %c0_i32_0 : i32, i32
  }
  func.func @transform_16(%arg0: i32, %arg1: i32) -> (i32, i32) {
    %c0_i32 = arith.constant 0 : i32
    %c0_i32_0 = arith.constant 0 : i32
    %c0_i32_1 = arith.constant 0 : i32
    return %c0_i32, %c0_i32_0 : i32, i32
  }
  func.func @transform_17(%arg0: i32, %arg1: i32) -> (i32, i32) {
    %c0_i32 = arith.constant 0 : i32
    %c0_i32_0 = arith.constant 0 : i32
    %c0_i32_1 = arith.constant 0 : i32
    return %c0_i32, %c0_i32_0 : i32, i32
  }
  func.func @transform_18(%arg0: i32, %arg1: i32) -> (i32, i32) {
    %c0_i32 = arith.constant 0 : i32
    %c0_i32_0 = arith.constant 0 : i32
    %c0_i32_1 = arith.constant 0 : i32
    return %c0_i32, %c0_i32_0 : i32, i32
  }
  func.func @transform_19(%arg0: i32, %arg1: i32) -> (i32, i32, i32) {
    %c0_i32 = arith.constant 0 : i32
    %c0_i32_0 = arith.constant 0 : i32
    return %arg0, %arg1, %c0_i32 : i32, i32, i32
  }
  func.func @transform_20(%arg0: i32, %arg1: i32) -> (i32, i32, i32, i32) {
    %c0_i32 = arith.constant 0 : i32
    %c0_i32_0 = arith.constant 0 : i32
    %c0_i32_1 = arith.constant 0 : i32
    return %arg0, %c0_i32, %arg1, %c0_i32_0 : i32, i32, i32, i32
  }
}

</mosaic_0001>

<llo_original>
// kernel: tpu_custom_call.1
$region0: #{tpu_custom_call.1}
  #allocation0 [shape = 'u32[]', space=smem, size = 0x4, offset = 0x4, fixed_abs, tag = 'smem constant byte address 0x4 - core index']
  #allocation1 [shape = 'u32[144,128]{1,0:T(1,128)}', space=vmem, size = 0x12000, scoped, tag = 'internal scratch']
  #allocation2 [shape = 'bf16[8,32]{1,0:T(8,128)(2,1)}', space=vmem, size = 0x800, scoped, tag = 'scratch operand']
  #allocation3 [shape = 'bf16[8,32]{1,0:T(8,128)(2,1)}', space=vmem, size = 0x800, scoped, tag = 'scratch operand']
  %s0 = inlined_call_operand.hbm [shape: bf16[2,8,32], index: 0, kind: input, shape index: {}]
  %s1 = inlined_call_operand.hbm [shape: bf16[2,8,32], index: 1, kind: input, shape index: {}]
  %s2 = inlined_call_operand.hbm [shape: bf16[2,8,32], index: 2, kind: input, shape index: {}]
  %s3 = inlined_call_operand.vmem [shape: bf16[32,32], index: 3, kind: input, shape index: {}]
  %s4 = inlined_call_operand.vmem [shape: f32[1,32], index: 4, kind: input, shape index: {}]
  %s5 = inlined_call_operand.vmem [shape: bf16[32,32], index: 5, kind: input, shape index: {}]
  %s6 = inlined_call_operand.hbm [shape: f32[1,32], index: 6, kind: input, shape index: {}]
  %s7 = inlined_call_operand.vmem [shape: bf16[32,32], index: 7, kind: input, shape index: {}]
  %s8 = inlined_call_operand.hbm [shape: f32[1,32], index: 8, kind: input, shape index: {}]
  %s9 = inlined_call_operand.vmem [shape: bf16[32,32], index: 9, kind: input, shape index: {}]
  %s10 = inlined_call_operand.hbm [shape: f32[1,32], index: 10, kind: input, shape index: {}]
  %s11 = inlined_call_operand.hbm [shape: f32[1,32], index: 11, kind: input, shape index: {}]
  %s12 = inlined_call_operand.hbm [shape: f32[1,32], index: 12, kind: input, shape index: {}]
  %s13 = inlined_call_operand.hbm [shape: f32[1,32], index: 13, kind: input, shape index: {}]
  %s14 = inlined_call_operand.vmem [shape: f32[1,32], index: 14, kind: input, shape index: {}]
  %s15 = inlined_call_operand.vmem [shape: bf16[32,64], index: 15, kind: input, shape index: {}]
  %s16 = inlined_call_operand.vmem [shape: f32[1,64], index: 16, kind: input, shape index: {}]
  %s17 = inlined_call_operand.vmem [shape: bf16[64,32], index: 17, kind: input, shape index: {}]
  %s18 = inlined_call_operand.vmem [shape: f32[1,32], index: 18, kind: input, shape index: {}]
  %s19 = inlined_call_operand.hbm [shape: f32[2,8,32], index: 19, kind: output, shape index: {0}]
  %s20 = inlined_call_operand.hbm [shape: f32[2,4,8,8], index: 20, kind: output, shape index: {1}]
  %21 = xla_tuple %s19, %s20
  %s22 = sld [smem:[#allocation0]]
  $region157: #{tpu_custom_call.1} parent=0
    _
  %s24 = ssub.s32 1, %s22
  %s25 = scalar_select 0, %s24, %s22
  $region1: #{tpu_custom_call.1} parent=0
    #allocation4 [shape = 'u8[4096]{0}', space=vmem, size = 0x1000, scoped, tag = 'input window, operand 0']
    #allocation5 [shape = 's32[2]{0}', space=sflag, size = 0x8, scoped, tag = 'scoped memory for tpu_custom_call.1']
    #allocation6 [shape = 's32[2]{0}', space=sflag, size = 0x8, scoped, tag = 'scoped memory for tpu_custom_call.1']
    #allocation7 [shape = 'u8[4096]{0}', space=vmem, size = 0x1000, scoped, tag = 'input window, operand 1']
    #allocation8 [shape = 's32[2]{0}', space=sflag, size = 0x8, scoped, tag = 'scoped memory for tpu_custom_call.1']
    #allocation9 [shape = 'u8[4096]{0}', space=vmem, size = 0x1000, scoped, tag = 'input window, operand 2']
    #allocation10 [shape = 'u8[512]{0}', space=vmem, size = 0x400, scoped, tag = 'input window, operand 6, single buffered']
    #allocation11 [shape = 's32[1]{0}', space=sflag, size = 0x4, scoped, tag = 'scoped memory for tpu_custom_call.1']
    #allocation12 [shape = 'u8[512]{0}', space=vmem, size = 0x400, scoped, tag = 'input window, operand 8, single buffered']
    #allocation13 [shape = 'u8[512]{0}', space=vmem, size = 0x400, scoped, tag = 'input window, operand 10, single buffered']
    #allocation14 [shape = 's32[1]{0}', space=sflag, size = 0x4, scoped, tag = 'scoped memory for tpu_custom_call.1']
    #allocation15 [shape = 'u8[512]{0}', space=vmem, size = 0x400, scoped, tag = 'input window, operand 11, single buffered']
    #allocation16 [shape = 'u8[512]{0}', space=vmem, size = 0x400, scoped, tag = 'input window, operand 12, single buffered']
    #allocation17 [shape = 's32[1]{0}', space=sflag, size = 0x4, scoped, tag = 'scoped memory for tpu_custom_call.1']
    #allocation18 [shape = 'u8[512]{0}', space=vmem, size = 0x400, scoped, tag = 'input window, operand 13, single buffered']
    #allocation19 [shape = 'u8[8192]{0}', space=vmem, size = 0x2000, scoped, tag = 'output window, operand 0']
    #allocation20 [shape = 'u8[32768]{0}', space=vmem, size = 0x8000, scoped, tag = 'output window, operand 1']
    #allocation21 [shape = 's32[2]{0}', space=sflag, size = 0x8, scoped, tag = 'scoped memory for tpu_custom_call.1']
    %26 = vsyncpa [#allocation5], 0
    %s27 = scalar_lea.sflag [#allocation5], 1
    %28 = vsyncpa %s27, 0
    %29 = vsyncpa [#allocation8], 0
    %s30 = scalar_lea.sflag [#allocation8], 1
    %31 = vsyncpa %s30, 0
    %32 = vsyncpa [#allocation11], 0
    %33 = vsyncpa [#allocation14], 0
    %34 = vsyncpa [#allocation17], 0
    %35 = vsyncpa [#allocation6], 0
    %s36 = scalar_lea.sflag [#allocation6], 1
    %37 = vsyncpa %s36, 0
    %38 = vsyncpa [#allocation21], 0
    %s39 = scalar_lea.sflag [#allocation21], 1
    %40 = vsyncpa %s39, 0
    loop: start=0, step=1, limit=4
    $region2: #{tpu_custom_call.1} parent=1 // loop_pre_header
      _
    $region3: #{tpu_custom_call.1} parent=1 // loop_header
      %s42 = sphi 0, %s46
      %p43 = scmp.ge.s32.totalorder %s42, 4
      %s49 = sphi 0, %s61
      %s50 = sphi 0, %s57
      %s51 = sphi 0, %s49
      %s52 = sphi 0, %s50
      %s53 = sphi 0, %s51
      %s54 = sphi 0, %s52
      %s66 = sphi 0, %s68
      %s69 = sphi 0, %s66
      %s70 = sphi 0, %s69
      %s86 = sphi 0, %s70
      %s92 = sphi 0, %s94
      %s95 = sphi 0, %s92
      %s96 = sphi 0, %s95
      %s112 = sphi 0, %s96
      %s118 = sphi 0, %s120
      %s121 = sphi 0, %s118
      %s122 = sphi 0, %s121
      %s138 = sphi 0, %s122
      %s142 = sphi 0, %s142
      %s144 = sphi 0, %s142
      %s145 = sphi 0, %s144
      %s159 = sphi 0, %s145
      %s163 = sphi 0, %s163
      %s165 = sphi 0, %s163
      %s166 = sphi 0, %s165
      %s180 = sphi 0, %s166
      %s184 = sphi 0, %s184
      %s186 = sphi 0, %s184
      %s187 = sphi 0, %s186
      %s201 = sphi 0, %s187
      %s205 = sphi 0, %s205
      %s207 = sphi 0, %s205
      %s208 = sphi 0, %s207
      %s222 = sphi 0, %s208
      %s226 = sphi 0, %s226
      %s228 = sphi 0, %s226
      %s229 = sphi 0, %s228
      %s243 = sphi 0, %s229
      %s247 = sphi 0, %s247
      %s249 = sphi 0, %s247
      %s250 = sphi 0, %s249
      %s264 = sphi 0, %s250
      %s268 = sphi 0, %s268
      %s270 = sphi 0, %s268
      %s271 = sphi 0, %s270
      %s285 = sphi 0, %s271
      %s289 = sphi 0, %s289
      %s291 = sphi 0, %s289
      %s292 = sphi 0, %s291
      %s306 = sphi 0, %s292
      %s310 = sphi 0, %s310
      %s312 = sphi 0, %s310
      %s313 = sphi 0, %s312
      %s327 = sphi 0, %s313
      %s331 = sphi 0, %s331
      %s333 = sphi 0, %s331
      %s334 = sphi 0, %s333
      %s348 = sphi 0, %s334
      %s352 = sphi 0, %s352
      %s354 = sphi 0, %s352
      %s355 = sphi 0, %s354
      %s369 = sphi 0, %s355
      %s373 = sphi 0, %s373
      %s375 = sphi 0, %s373
      %s376 = sphi 0, %s375
      %s390 = sphi 0, %s376
      %s394 = sphi 0, %s394
      %s396 = sphi 0, %s394
      %s397 = sphi 0, %s396
      %s411 = sphi 0, %s397
      %s415 = sphi 0, %s415
      %s417 = sphi 0, %s415
      %s418 = sphi 0, %s417
      %s432 = sphi 0, %s418
      %s436 = sphi 0, %s436
      %s438 = sphi 0, %s436
      %s439 = sphi 0, %s438
      %s453 = sphi 0, %s439
      %s457 = sphi 0, %s457
      %s459 = sphi 0, %s457
      %s460 = sphi 0, %s459
      %s474 = sphi 0, %s460
      %s482 = sphi 0, %s484
      %s485 = sphi 0, %s482
      %s486 = sphi 0, %s485
      %s502 = sphi 0, %s486
      %s510 = sphi 0, %s512
      %s513 = sphi 0, %s510
      %s514 = sphi 0, %s513
      %s530 = sphi 0, %s514
    $region4: #{tpu_custom_call.1} parent=1 // loop_header_branch
      %45 = sbr.rel (%p43) target = $region8
    $region5: #{tpu_custom_call.1} parent=1 // loop_body
      %s47 = ssub.s32 %s42, 1
      %s48 = ssub.s32 %s42, 2
      %s55 = sadd.s32 1, %s50
      %p56 = scmp.ge.s32.totalorder %s55, 1
      %s57 = scalar_select %p56, 0, %s55
      %s58 = sadd.s32 1, %s49
      %s59 = scalar_select %p56, %s58, %s49
      %p60 = scmp.ge.s32.totalorder %s59, 2
      %s61 = scalar_select %p60, 0, %s59
      %s62 = ssub.s32 %s49, %s61
      %s63 = ssub.s32 %s50, %s57
      %s64 = sor.u32 %s62, %s63
      %p65 = scmp.eq.s32.totalorder %s64, 0
      %s67 = sadd.s32 %s66, 1
      %s68 = scalar_select %p65, %s66, %s67
      %p71 = pneg %p65
      %p72 = scmp.eq.s32.totalorder %s42, 1
      %p73 = por %p71, %p72
      %p74 = scmp.ne.s32.totalorder %s66, %s69
      %p75 = scmp.eq.s32.totalorder %s42, 0
      %p76 = por %p74, %p75
      %p77 = scmp.ne.s32.totalorder %s66, %s69
      %p78 = scmp.eq.s32.totalorder %s47, 1
      %p79 = por %p77, %p78
      %p80 = scmp.ne.s32.totalorder %s69, %s70
      %p81 = scmp.eq.s32.totalorder %s47, 0
      %p82 = por %p80, %p81
      %p83 = scmp.ne.s32.totalorder %s69, %s70
      %p84 = scmp.eq.s32.totalorder %s48, 1
      %p85 = por %p83, %p84
      %p87 = scmp.ne.s32.totalorder %s70, %s86
      %p88 = scmp.eq.s32.totalorder %s48, 0
      %p89 = por %p87, %p88
      %s90 = ssub.s32 %s49, %s61
      %p91 = scmp.eq.s32.totalorder %s90, 0
      %s93 = sadd.s32 %s92, 1
      %s94 = scalar_select %p91, %s92, %s93
      %p97 = pneg %p91
      %p98 = scmp.eq.s32.totalorder %s42, 1
      %p99 = por %p97, %p98
      %p100 = scmp.ne.s32.totalorder %s92, %s95
      %p101 = scmp.eq.s32.totalorder %s42, 0
      %p102 = por %p100, %p101
      %p103 = scmp.ne.s32.totalorder %s92, %s95
      %p104 = scmp.eq.s32.totalorder %s47, 1
      %p105 = por %p103, %p104
      %p106 = scmp.ne.s32.totalorder %s95, %s96
      %p107 = scmp.eq.s32.totalorder %s47, 0
      %p108 = por %p106, %p107
      %p109 = scmp.ne.s32.totalorder %s95, %s96
      %p110 = scmp.eq.s32.totalorder %s48, 1
      %p111 = por %p109, %p110
      %p113 = scmp.ne.s32.totalorder %s96, %s112
      %p114 = scmp.eq.s32.totalorder %s48, 0
      %p115 = por %p113, %p114
      %s116 = ssub.s32 %s49, %s61
      %p117 = scmp.eq.s32.totalorder %s116, 0
      %s119 = sadd.s32 %s118, 1
      %s120 = scalar_select %p117, %s118, %s119
      %p123 = pneg %p117
      %p124 = scmp.eq.s32.totalorder %s42, 1
      %p125 = por %p123, %p124
      %p126 = scmp.ne.s32.totalorder %s118, %s121
      %p127 = scmp.eq.s32.totalorder %s42, 0
      %p128 = por %p126, %p127
      %p129 = scmp.ne.s32.totalorder %s118, %s121
      %p130 = scmp.eq.s32.totalorder %s47, 1
      %p131 = por %p129, %p130
      %p132 = scmp.ne.s32.totalorder %s121, %s122
      %p133 = scmp.eq.s32.totalorder %s47, 0
      %p134 = por %p132, %p133
      %p135 = scmp.ne.s32.totalorder %s121, %s122
      %p136 = scmp.eq.s32.totalorder %s48, 1
      %p137 = por %p135, %p136
      %p139 = scmp.ne.s32.totalorder %s122, %s138
      %p140 = scmp.eq.s32.totalorder %s48, 0
      %p141 = por %p139, %p140
      %s143 = sadd.s32 %s142, 1
      %p146 = scmp.eq.s32.totalorder %s42, 1
      %p147 = scmp.ne.s32.totalorder %s142, %s144
      %p148 = scmp.eq.s32.totalorder %s42, 0
      %p149 = por %p147, %p148
      %p150 = scmp.ne.s32.totalorder %s142, %s144
      %p151 = scmp.eq.s32.totalorder %s47, 1
      %p152 = por %p150, %p151
      %p153 = scmp.ne.s32.totalorder %s144, %s145
      %p154 = scmp.eq.s32.totalorder %s47, 0
      %p155 = por %p153, %p154
      %p156 = scmp.ne.s32.totalorder %s144, %s145
      %p157 = scmp.eq.s32.totalorder %s48, 1
      %p158 = por %p156, %p157
      %p160 = scmp.ne.s32.totalorder %s145, %s159
      %p161 = scmp.eq.s32.totalorder %s48, 0
      %p162 = por %p160, %p161
      %s164 = sadd.s32 %s163, 1
      %p167 = scmp.eq.s32.totalorder %s42, 1
      %p168 = scmp.ne.s32.totalorder %s163, %s165
      %p169 = scmp.eq.s32.totalorder %s42, 0
      %p170 = por %p168, %p169
      %p171 = scmp.ne.s32.totalorder %s163, %s165
      %p172 = scmp.eq.s32.totalorder %s47, 1
      %p173 = por %p171, %p172
      %p174 = scmp.ne.s32.totalorder %s165, %s166
      %p175 = scmp.eq.s32.totalorder %s47, 0
      %p176 = por %p174, %p175
      %p177 = scmp.ne.s32.totalorder %s165, %s166
      %p178 = scmp.eq.s32.totalorder %s48, 1
      %p179 = por %p177, %p178
      %p181 = scmp.ne.s32.totalorder %s166, %s180
      %p182 = scmp.eq.s32.totalorder %s48, 0
      %p183 = por %p181, %p182
      %s185 = sadd.s32 %s184, 1
      %p188 = scmp.eq.s32.totalorder %s42, 1
      %p189 = scmp.ne.s32.totalorder %s184, %s186
      %p190 = scmp.eq.s32.totalorder %s42, 0
      %p191 = por %p189, %p190
      %p192 = scmp.ne.s32.totalorder %s184, %s186
      %p193 = scmp.eq.s32.totalorder %s47, 1
      %p194 = por %p192, %p193
      %p195 = scmp.ne.s32.totalorder %s186, %s187
      %p196 = scmp.eq.s32.totalorder %s47, 0
      %p197 = por %p195, %p196
      %p198 = scmp.ne.s32.totalorder %s186, %s187
      %p199 = scmp.eq.s32.totalorder %s48, 1
      %p200 = por %p198, %p199
      %p202 = scmp.ne.s32.totalorder %s187, %s201
      %p203 = scmp.eq.s32.totalorder %s48, 0
      %p204 = por %p202, %p203
      %s206 = sadd.s32 %s205, 1
      %p209 = scmp.eq.s32.totalorder %s42, 1
      %p210 = scmp.ne.s32.totalorder %s205, %s207
      %p211 = scmp.eq.s32.totalorder %s42, 0
      %p212 = por %p210, %p211
      %p213 = scmp.ne.s32.totalorder %s205, %s207
      %p214 = scmp.eq.s32.totalorder %s47, 1
      %p215 = por %p213, %p214
      %p216 = scmp.ne.s32.totalorder %s207, %s208
      %p217 = scmp.eq.s32.totalorder %s47, 0
      %p218 = por %p216, %p217
      %p219 = scmp.ne.s32.totalorder %s207, %s208
      %p220 = scmp.eq.s32.totalorder %s48, 1
      %p221 = por %p219, %p220
      %p223 = scmp.ne.s32.totalorder %s208, %s222
      %p224 = scmp.eq.s32.totalorder %s48, 0
      %p225 = por %p223, %p224
      %s227 = sadd.s32 %s226, 1
      %p230 = scmp.eq.s32.totalorder %s42, 1
      %p231 = scmp.ne.s32.totalorder %s226, %s228
      %p232 = scmp.eq.s32.totalorder %s42, 0
      %p233 = por %p231, %p232
      %p234 = scmp.ne.s32.totalorder %s226, %s228
      %p235 = scmp.eq.s32.totalorder %s47, 1
      %p236 = por %p234, %p235
      %p237 = scmp.ne.s32.totalorder %s228, %s229
      %p238 = scmp.eq.s32.totalorder %s47, 0
      %p239 = por %p237, %p238
      %p240 = scmp.ne.s32.totalorder %s228, %s229
      %p241 = scmp.eq.s32.totalorder %s48, 1
      %p242 = por %p240, %p241
      %p244 = scmp.ne.s32.totalorder %s229, %s243
      %p245 = scmp.eq.s32.totalorder %s48, 0
      %p246 = por %p244, %p245
      %s248 = sadd.s32 %s247, 1
      %p251 = scmp.eq.s32.totalorder %s42, 1
      %p252 = scmp.ne.s32.totalorder %s247, %s249
      %p253 = scmp.eq.s32.totalorder %s42, 0
      %p254 = por %p252, %p253
      %p255 = scmp.ne.s32.totalorder %s247, %s249
      %p256 = scmp.eq.s32.totalorder %s47, 1
      %p257 = por %p255, %p256
      %p258 = scmp.ne.s32.totalorder %s249, %s250
      %p259 = scmp.eq.s32.totalorder %s47, 0
      %p260 = por %p258, %p259
      %p261 = scmp.ne.s32.totalorder %s249, %s250
      %p262 = scmp.eq.s32.totalorder %s48, 1
      %p263 = por %p261, %p262
      %p265 = scmp.ne.s32.totalorder %s250, %s264
      %p266 = scmp.eq.s32.totalorder %s48, 0
      %p267 = por %p265, %p266
      %s269 = sadd.s32 %s268, 1
      %p272 = scmp.eq.s32.totalorder %s42, 1
      %p273 = scmp.ne.s32.totalorder %s268, %s270
      %p274 = scmp.eq.s32.totalorder %s42, 0
      %p275 = por %p273, %p274
      %p276 = scmp.ne.s32.totalorder %s268, %s270
      %p277 = scmp.eq.s32.totalorder %s47, 1
      %p278 = por %p276, %p277
      %p279 = scmp.ne.s32.totalorder %s270, %s271
      %p280 = scmp.eq.s32.totalorder %s47, 0
      %p281 = por %p279, %p280
      %p282 = scmp.ne.s32.totalorder %s270, %s271
      %p283 = scmp.eq.s32.totalorder %s48, 1
      %p284 = por %p282, %p283
      %p286 = scmp.ne.s32.totalorder %s271, %s285
      %p287 = scmp.eq.s32.totalorder %s48, 0
      %p288 = por %p286, %p287
      %s290 = sadd.s32 %s289, 1
      %p293 = scmp.eq.s32.totalorder %s42, 1
      %p294 = scmp.ne.s32.totalorder %s289, %s291
      %p295 = scmp.eq.s32.totalorder %s42, 0
      %p296 = por %p294, %p295
      %p297 = scmp.ne.s32.totalorder %s289, %s291
      %p298 = scmp.eq.s32.totalorder %s47, 1
      %p299 = por %p297, %p298
      %p300 = scmp.ne.s32.totalorder %s291, %s292
      %p301 = scmp.eq.s32.totalorder %s47, 0
      %p302 = por %p300, %p301
      %p303 = scmp.ne.s32.totalorder %s291, %s292
      %p304 = scmp.eq.s32.totalorder %s48, 1
      %p305 = por %p303, %p304
      %p307 = scmp.ne.s32.totalorder %s292, %s306
      %p308 = scmp.eq.s32.totalorder %s48, 0
      %p309 = por %p307, %p308
      %s311 = sadd.s32 %s310, 1
      %p314 = scmp.eq.s32.totalorder %s42, 1
      %p315 = scmp.ne.s32.totalorder %s310, %s312
      %p316 = scmp.eq.s32.totalorder %s42, 0
      %p317 = por %p315, %p316
      %p318 = scmp.ne.s32.totalorder %s310, %s312
      %p319 = scmp.eq.s32.totalorder %s47, 1
      %p320 = por %p318, %p319
      %p321 = scmp.ne.s32.totalorder %s312, %s313
      %p322 = scmp.eq.s32.totalorder %s47, 0
      %p323 = por %p321, %p322
      %p324 = scmp.ne.s32.totalorder %s312, %s313
      %p325 = scmp.eq.s32.totalorder %s48, 1
      %p326 = por %p324, %p325
      %p328 = scmp.ne.s32.totalorder %s313, %s327
      %p329 = scmp.eq.s32.totalorder %s48, 0
      %p330 = por %p328, %p329
      %s332 = sadd.s32 %s331, 1
      %p335 = scmp.eq.s32.totalorder %s42, 1
      %p336 = scmp.ne.s32.totalorder %s331, %s333
      %p337 = scmp.eq.s32.totalorder %s42, 0
      %p338 = por %p336, %p337
      %p339 = scmp.ne.s32.totalorder %s331, %s333
      %p340 = scmp.eq.s32.totalorder %s47, 1
      %p341 = por %p339, %p340
      %p342 = scmp.ne.s32.totalorder %s333, %s334
      %p343 = scmp.eq.s32.totalorder %s47, 0
      %p344 = por %p342, %p343
      %p345 = scmp.ne.s32.totalorder %s333, %s334
      %p346 = scmp.eq.s32.totalorder %s48, 1
      %p347 = por %p345, %p346
      %p349 = scmp.ne.s32.totalorder %s334, %s348
      %p350 = scmp.eq.s32.totalorder %s48, 0
      %p351 = por %p349, %p350
      %s353 = sadd.s32 %s352, 1
      %p356 = scmp.eq.s32.totalorder %s42, 1
      %p357 = scmp.ne.s32.totalorder %s352, %s354
      %p358 = scmp.eq.s32.totalorder %s42, 0
      %p359 = por %p357, %p358
      %p360 = scmp.ne.s32.totalorder %s352, %s354
      %p361 = scmp.eq.s32.totalorder %s47, 1
      %p362 = por %p360, %p361
      %p363 = scmp.ne.s32.totalorder %s354, %s355
      %p364 = scmp.eq.s32.totalorder %s47, 0
      %p365 = por %p363, %p364
      %p366 = scmp.ne.s32.totalorder %s354, %s355
      %p367 = scmp.eq.s32.totalorder %s48, 1
      %p368 = por %p366, %p367
      %p370 = scmp.ne.s32.totalorder %s355, %s369
      %p371 = scmp.eq.s32.totalorder %s48, 0
      %p372 = por %p370, %p371
      %s374 = sadd.s32 %s373, 1
      %p377 = scmp.eq.s32.totalorder %s42, 1
      %p378 = scmp.ne.s32.totalorder %s373, %s375
      %p379 = scmp.eq.s32.totalorder %s42, 0
      %p380 = por %p378, %p379
      %p381 = scmp.ne.s32.totalorder %s373, %s375
      %p382 = scmp.eq.s32.totalorder %s47, 1
      %p383 = por %p381, %p382
      %p384 = scmp.ne.s32.totalorder %s375, %s376
      %p385 = scmp.eq.s32.totalorder %s47, 0
      %p386 = por %p384, %p385
      %p387 = scmp.ne.s32.totalorder %s375, %s376
      %p388 = scmp.eq.s32.totalorder %s48, 1
      %p389 = por %p387, %p388
      %p391 = scmp.ne.s32.totalorder %s376, %s390
      %p392 = scmp.eq.s32.totalorder %s48, 0
      %p393 = por %p391, %p392
      %s395 = sadd.s32 %s394, 1
      %p398 = scmp.eq.s32.totalorder %s42, 1
      %p399 = scmp.ne.s32.totalorder %s394, %s396
      %p400 = scmp.eq.s32.totalorder %s42, 0
      %p401 = por %p399, %p400
      %p402 = scmp.ne.s32.totalorder %s394, %s396
      %p403 = scmp.eq.s32.totalorder %s47, 1
      %p404 = por %p402, %p403
      %p405 = scmp.ne.s32.totalorder %s396, %s397
      %p406 = scmp.eq.s32.totalorder %s47, 0
      %p407 = por %p405, %p406
      %p408 = scmp.ne.s32.totalorder %s396, %s397
      %p409 = scmp.eq.s32.totalorder %s48, 1
      %p410 = por %p408, %p409
      %p412 = scmp.ne.s32.totalorder %s397, %s411
      %p413 = scmp.eq.s32.totalorder %s48, 0
      %p414 = por %p412, %p413
      %s416 = sadd.s32 %s415, 1
      %p419 = scmp.eq.s32.totalorder %s42, 1
      %p420 = scmp.ne.s32.totalorder %s415, %s417
      %p421 = scmp.eq.s32.totalorder %s42, 0
      %p422 = por %p420, %p421
      %p423 = scmp.ne.s32.totalorder %s415, %s417
      %p424 = scmp.eq.s32.totalorder %s47, 1
      %p425 = por %p423, %p424
      %p426 = scmp.ne.s32.totalorder %s417, %s418
      %p427 = scmp.eq.s32.totalorder %s47, 0
      %p428 = por %p426, %p427
      %p429 = scmp.ne.s32.totalorder %s417, %s418
      %p430 = scmp.eq.s32.totalorder %s48, 1
      %p431 = por %p429, %p430
      %p433 = scmp.ne.s32.totalorder %s418, %s432
      %p434 = scmp.eq.s32.totalorder %s48, 0
      %p435 = por %p433, %p434
      %s437 = sadd.s32 %s436, 1
      %p440 = scmp.eq.s32.totalorder %s42, 1
      %p441 = scmp.ne.s32.totalorder %s436, %s438
      %p442 = scmp.eq.s32.totalorder %s42, 0
      %p443 = por %p441, %p442
      %p444 = scmp.ne.s32.totalorder %s436, %s438
      %p445 = scmp.eq.s32.totalorder %s47, 1
      %p446 = por %p444, %p445
      %p447 = scmp.ne.s32.totalorder %s438, %s439
      %p448 = scmp.eq.s32.totalorder %s47, 0
      %p449 = por %p447, %p448
      %p450 = scmp.ne.s32.totalorder %s438, %s439
      %p451 = scmp.eq.s32.totalorder %s48, 1
      %p452 = por %p450, %p451
      %p454 = scmp.ne.s32.totalorder %s439, %s453
      %p455 = scmp.eq.s32.totalorder %s48, 0
      %p456 = por %p454, %p455
      %s458 = sadd.s32 %s457, 1
      %p461 = scmp.eq.s32.totalorder %s42, 1
      %p462 = scmp.ne.s32.totalorder %s457, %s459
      %p463 = scmp.eq.s32.totalorder %s42, 0
      %p464 = por %p462, %p463
      %p465 = scmp.ne.s32.totalorder %s457, %s459
      %p466 = scmp.eq.s32.totalorder %s47, 1
      %p467 = por %p465, %p466
      %p468 = scmp.ne.s32.totalorder %s459, %s460
      %p469 = scmp.eq.s32.totalorder %s47, 0
      %p470 = por %p468, %p469
      %p471 = scmp.ne.s32.totalorder %s459, %s460
      %p472 = scmp.eq.s32.totalorder %s48, 1
      %p473 = por %p471, %p472
      %p475 = scmp.ne.s32.totalorder %s460, %s474
      %p476 = scmp.eq.s32.totalorder %s48, 0
      %p477 = por %p475, %p476
      %s478 = ssub.s32 %s49, %s61
      %s479 = ssub.s32 %s50, %s57
      %s480 = sor.u32 %s478, %s479
      %p481 = scmp.eq.s32.totalorder %s480, 0
      %s483 = sadd.s32 %s482, 1
      %s484 = scalar_select %p481, %s482, %s483
      %p487 = pneg %p481
      %p488 = scmp.eq.s32.totalorder %s42, 1
      %p489 = por %p487, %p488
      %p490 = scmp.ne.s32.totalorder %s482, %s485
      %p491 = scmp.eq.s32.totalorder %s42, 0
      %p492 = por %p490, %p491
      %p493 = scmp.ne.s32.totalorder %s482, %s485
      %p494 = scmp.eq.s32.totalorder %s47, 1
      %p495 = por %p493, %p494
      %p496 = scmp.ne.s32.totalorder %s485, %s486
      %p497 = scmp.eq.s32.totalorder %s47, 0
      %p498 = por %p496, %p497
      %p499 = scmp.ne.s32.totalorder %s485, %s486
      %p500 = scmp.eq.s32.totalorder %s48, 1
      %p501 = por %p499, %p500
      %p503 = scmp.ne.s32.totalorder %s486, %s502
      %p504 = scmp.eq.s32.totalorder %s48, 0
      %p505 = por %p503, %p504
      %s506 = ssub.s32 %s49, %s61
      %s507 = ssub.s32 %s50, %s57
      %s508 = sor.u32 %s506, %s507
      %p509 = scmp.eq.s32.totalorder %s508, 0
      %s511 = sadd.s32 %s510, 1
      %s512 = scalar_select %p509, %s510, %s511
      %p515 = pneg %p509
      %p516 = scmp.eq.s32.totalorder %s42, 1
      %p517 = por %p515, %p516
      %p518 = scmp.ne.s32.totalorder %s510, %s513
      %p519 = scmp.eq.s32.totalorder %s42, 0
      %p520 = por %p518, %p519
      %p521 = scmp.ne.s32.totalorder %s510, %s513
      %p522 = scmp.eq.s32.totalorder %s47, 1
      %p523 = por %p521, %p522
      %p524 = scmp.ne.s32.totalorder %s513, %s514
      %p525 = scmp.eq.s32.totalorder %s47, 0
      %p526 = por %p524, %p525
      %p527 = scmp.ne.s32.totalorder %s513, %s514
      %p528 = scmp.eq.s32.totalorder %s48, 1
      %p529 = por %p527, %p528
      %p531 = scmp.ne.s32.totalorder %s514, %s530
      %p532 = scmp.eq.s32.totalorder %s48, 0
      %p533 = por %p531, %p532
      %p534 = scmp.le.s32.totalorder 1, %s42
      %p535 = scmp.lt.s32.totalorder %s42, 3
      %p536 = pnand %p534, %p535
      %p537 = pneg %p536
      // Predicated region
      $region9: #{tpu_custom_call.1} parent=5 // pred_check
        _
      $region10: #{tpu_custom_call.1} parent=5 // pred_check_branch
        %539 = sbr.rel (%p536) target = $region12
      $region11: #{tpu_custom_call.1} parent=5 // pred_region
        %s540 = ssub.s32 %s42, 1
        // Predicated region
        $region13: #{tpu_custom_call.1} parent=11 // pred_check
          %p541 = pneg %p155
        $region14: #{tpu_custom_call.1} parent=11 // pred_check_branch
          %543 = sbr.rel (%p541) target = $region16
        $region15: #{tpu_custom_call.1} parent=11 // pred_region
          _
        $region16: #{tpu_custom_call.1} parent=11 // pred_fallthru
          _
        // Predicated region
        $region17: #{tpu_custom_call.1} parent=11 // pred_check
          %p544 = pneg %p176
        $region18: #{tpu_custom_call.1} parent=11 // pred_check_branch
          %546 = sbr.rel (%p544) target = $region20
        $region19: #{tpu_custom_call.1} parent=11 // pred_region
          _
        $region20: #{tpu_custom_call.1} parent=11 // pred_fallthru
          _
        // Predicated region
        $region21: #{tpu_custom_call.1} parent=11 // pred_check
          %p547 = pneg %p197
        $region22: #{tpu_custom_call.1} parent=11 // pred_check_branch
          %549 = sbr.rel (%p547) target = $region24
        $region23: #{tpu_custom_call.1} parent=11 // pred_region
          _
        $region24: #{tpu_custom_call.1} parent=11 // pred_fallthru
          _
        // Predicated region
        $region25: #{tpu_custom_call.1} parent=11 // pred_check
          %p550 = pneg %p218
        $region26: #{tpu_custom_call.1} parent=11 // pred_check_branch
          %552 = sbr.rel (%p550) target = $region28
        $region27: #{tpu_custom_call.1} parent=11 // pred_region
          %s554 = ssub.s32 16, 16
          %555 = vsyncadd [#allocation11], %s554
          %s557 = sshll.u32 [#allocation10], 4
          %s558 = int_to_ptr.vmem [resolvable:$true] %s557
          %560 = dma.hbm_to_vmem [thread:$0]  %s6, 16, %s558, [#allocation11]
        $region28: #{tpu_custom_call.1} parent=11 // pred_fallthru
          _
        // Predicated region
        $region29: #{tpu_custom_call.1} parent=11 // pred_check
          %p561 = pneg %p239
        $region30: #{tpu_custom_call.1} parent=11 // pred_check_branch
          %563 = sbr.rel (%p561) target = $region32
        $region31: #{tpu_custom_call.1} parent=11 // pred_region
          _
        $region32: #{tpu_custom_call.1} parent=11 // pred_fallthru
          _
        // Predicated region
        $region33: #{tpu_custom_call.1} parent=11 // pred_check
          %p564 = pneg %p260
        $region34: #{tpu_custom_call.1} parent=11 // pred_check_branch
          %566 = sbr.rel (%p564) target = $region36
        $region35: #{tpu_custom_call.1} parent=11 // pred_region
          %s568 = ssub.s32 16, 16
          %569 = vsyncadd [#allocation11], %s568
          %s571 = sshll.u32 [#allocation12], 4
          %s572 = int_to_ptr.vmem [resolvable:$true] %s571
          %574 = dma.hbm_to_vmem [thread:$0]  %s8, 16, %s572, [#allocation11]
        $region36: #{tpu_custom_call.1} parent=11 // pred_fallthru
          _
        // Predicated region
        $region37: #{tpu_custom_call.1} parent=11 // pred_check
          %p575 = pneg %p281
        $region38: #{tpu_custom_call.1} parent=11 // pred_check_branch
          %577 = sbr.rel (%p575) target = $region40
        $region39: #{tpu_custom_call.1} parent=11 // pred_region
          _
        $region40: #{tpu_custom_call.1} parent=11 // pred_fallthru
          _
        // Predicated region
        $region41: #{tpu_custom_call.1} parent=11 // pred_check
          %p578 = pneg %p302
        $region42: #{tpu_custom_call.1} parent=11 // pred_check_branch
          %580 = sbr.rel (%p578) target = $region44
        $region43: #{tpu_custom_call.1} parent=11 // pred_region
          %s582 = ssub.s32 16, 16
          %583 = vsyncadd [#allocation14], %s582
          %s585 = sshll.u32 [#allocation13], 4
          %s586 = int_to_ptr.vmem [resolvable:$true] %s585
          %588 = dma.hbm_to_vmem [thread:$0]  %s10, 16, %s586, [#allocation14]
        $region44: #{tpu_custom_call.1} parent=11 // pred_fallthru
          _
        // Predicated region
        $region45: #{tpu_custom_call.1} parent=11 // pred_check
          %p589 = pneg %p323
        $region46: #{tpu_custom_call.1} parent=11 // pred_check_branch
          %591 = sbr.rel (%p589) target = $region48
        $region47: #{tpu_custom_call.1} parent=11 // pred_region
          %s593 = ssub.s32 16, 16
          %594 = vsyncadd [#allocation14], %s593
          %s596 = sshll.u32 [#allocation15], 4
          %s597 = int_to_ptr.vmem [resolvable:$true] %s596
          %599 = dma.hbm_to_vmem [thread:$0]  %s11, 16, %s597, [#allocation14]
        $region48: #{tpu_custom_call.1} parent=11 // pred_fallthru
          _
        // Predicated region
        $region49: #{tpu_custom_call.1} parent=11 // pred_check
          %p600 = pneg %p344
        $region50: #{tpu_custom_call.1} parent=11 // pred_check_branch
          %602 = sbr.rel (%p600) target = $region52
        $region51: #{tpu_custom_call.1} parent=11 // pred_region
          %s604 = ssub.s32 16, 16
          %605 = vsyncadd [#allocation17], %s604
          %s607 = sshll.u32 [#allocation16], 4
          %s608 = int_to_ptr.vmem [resolvable:$true] %s607
          %610 = dma.hbm_to_vmem [thread:$0]  %s12, 16, %s608, [#allocation17]
        $region52: #{tpu_custom_call.1} parent=11 // pred_fallthru
          _
        // Predicated region
        $region53: #{tpu_custom_call.1} parent=11 // pred_check
          %p611 = pneg %p365
        $region54: #{tpu_custom_call.1} parent=11 // pred_check_branch
          %613 = sbr.rel (%p611) target = $region56
        $region55: #{tpu_custom_call.1} parent=11 // pred_region
          %s615 = ssub.s32 16, 16
          %616 = vsyncadd [#allocation17], %s615
          %s618 = sshll.u32 [#allocation18], 4
          %s619 = int_to_ptr.vmem [resolvable:$true] %s618
          %621 = dma.hbm_to_vmem [thread:$0]  %s13, 16, %s619, [#allocation17]
        $region56: #{tpu_custom_call.1} parent=11 // pred_fallthru
          _
        // Predicated region
        $region57: #{tpu_custom_call.1} parent=11 // pred_check
          %p622 = pneg %p386
        $region58: #{tpu_custom_call.1} parent=11 // pred_check_branch
          %624 = sbr.rel (%p622) target = $region60
        $region59: #{tpu_custom_call.1} parent=11 // pred_region
          _
        $region60: #{tpu_custom_call.1} parent=11 // pred_fallthru
          _
        // Predicated region
        $region61: #{tpu_custom_call.1} parent=11 // pred_check
          %p625 = pneg %p407
        $region62: #{tpu_custom_call.1} parent=11 // pred_check_branch
          %627 = sbr.rel (%p625) target = $region64
        $region63: #{tpu_custom_call.1} parent=11 // pred_region
          _
        $region64: #{tpu_custom_call.1} parent=11 // pred_fallthru
          _
        // Predicated region
        $region65: #{tpu_custom_call.1} parent=11 // pred_check
          %p628 = pneg %p428
        $region66: #{tpu_custom_call.1} parent=11 // pred_check_branch
          %630 = sbr.rel (%p628) target = $region68
        $region67: #{tpu_custom_call.1} parent=11 // pred_region
          _
        $region68: #{tpu_custom_call.1} parent=11 // pred_fallthru
          _
        // Predicated region
        $region69: #{tpu_custom_call.1} parent=11 // pred_check
          %p631 = pneg %p449
        $region70: #{tpu_custom_call.1} parent=11 // pred_check_branch
          %633 = sbr.rel (%p631) target = $region72
        $region71: #{tpu_custom_call.1} parent=11 // pred_region
          _
        $region72: #{tpu_custom_call.1} parent=11 // pred_fallthru
          _
        // Predicated region
        $region73: #{tpu_custom_call.1} parent=11 // pred_check
          %p634 = pneg %p470
        $region74: #{tpu_custom_call.1} parent=11 // pred_check_branch
          %636 = sbr.rel (%p634) target = $region76
        $region75: #{tpu_custom_call.1} parent=11 // pred_region
          _
        $region76: #{tpu_custom_call.1} parent=11 // pred_fallthru
          _
      $region12: #{tpu_custom_call.1} parent=5 // pred_fallthru
        _
      %p637 = scmp.lt.s32.totalorder %s42, 2
      // Predicated region
      $region77: #{tpu_custom_call.1} parent=5 // pred_check
        %p638 = pneg %p637
      $region78: #{tpu_custom_call.1} parent=5 // pred_check_branch
        %640 = sbr.rel (%p638) target = $region80
      $region79: #{tpu_custom_call.1} parent=5 // pred_region
        // Predicated region
        $region81: #{tpu_custom_call.1} parent=79 // pred_check
          %p641 = pneg %p76
        $region82: #{tpu_custom_call.1} parent=79 // pred_check_branch
          %643 = sbr.rel (%p641) target = $region84
        $region83: #{tpu_custom_call.1} parent=79 // pred_region
          %s644 = sand.u32 %s66, 1
          %s645 = scalar_lea.sflag [#allocation5], %s644
          %s646 = sand.u32 %s66, 1
          %s647 = smul.addr %s646, 4
          %s648 = scalar_lea.vmem [#allocation4], %s647
          %s650 = ssub.s32 64, 64
          %651 = vsyncadd %s645, %s650
          %s652 = sadd.s32 %s50, %s49
          %s653 = smul.addr %s652, 64
          %s654 = scalar_lea.hbm %s0, %s653
          %s656 = sshll.u32 %s648, 4
          %s657 = int_to_ptr.vmem [resolvable:$true] %s656
          %659 = dma.hbm_to_vmem [thread:$0]  %s654, 64, %s657, %s645
        $region84: #{tpu_custom_call.1} parent=79 // pred_fallthru
          _
        // Predicated region
        $region85: #{tpu_custom_call.1} parent=79 // pred_check
          %p660 = pneg %p102
        $region86: #{tpu_custom_call.1} parent=79 // pred_check_branch
          %662 = sbr.rel (%p660) target = $region88
        $region87: #{tpu_custom_call.1} parent=79 // pred_region
          %s663 = sand.u32 %s42, 1
          %s664 = scalar_lea.sflag [#allocation8], %s663
          %s665 = sand.u32 %s92, 1
          %s666 = smul.addr %s665, 4
          %s667 = scalar_lea.vmem [#allocation7], %s666
          %s669 = ssub.s32 64, 64
          %670 = vsyncadd %s664, %s669
          %s671 = smul.addr %s49, 64
          %s672 = scalar_lea.hbm %s1, %s671
          %s674 = sshll.u32 %s667, 4
          %s675 = int_to_ptr.vmem [resolvable:$true] %s674
          %677 = dma.hbm_to_vmem [thread:$0]  %s672, 64, %s675, %s664
        $region88: #{tpu_custom_call.1} parent=79 // pred_fallthru
          _
        // Predicated region
        $region89: #{tpu_custom_call.1} parent=79 // pred_check
          %p678 = pneg %p128
        $region90: #{tpu_custom_call.1} parent=79 // pred_check_branch
          %680 = sbr.rel (%p678) target = $region92
        $region91: #{tpu_custom_call.1} parent=79 // pred_region
          %s681 = sand.u32 %s42, 1
          %s682 = scalar_lea.sflag [#allocation8], %s681
          %s683 = sand.u32 %s118, 1
          %s684 = smul.addr %s683, 4
          %s685 = scalar_lea.vmem [#allocation9], %s684
          %s687 = ssub.s32 64, 64
          %688 = vsyncadd %s682, %s687
          %s689 = smul.addr %s49, 64
          %s690 = scalar_lea.hbm %s2, %s689
          %s692 = sshll.u32 %s685, 4
          %s693 = int_to_ptr.vmem [resolvable:$true] %s692
          %695 = dma.hbm_to_vmem [thread:$0]  %s690, 64, %s693, %s682
        $region92: #{tpu_custom_call.1} parent=79 // pred_fallthru
          _
      $region80: #{tpu_custom_call.1} parent=5 // pred_fallthru
        _
      %p696 = scmp.le.s32.totalorder 1, %s42
      %p697 = scmp.lt.s32.totalorder %s42, 3
      %p698 = pnand %p696, %p697
      %p699 = pneg %p698
      // Predicated region
      $region93: #{tpu_custom_call.1} parent=5 // pred_check
        _
      $region94: #{tpu_custom_call.1} parent=5 // pred_check_branch
        %701 = sbr.rel (%p698) target = $region96
      $region95: #{tpu_custom_call.1} parent=5 // pred_region
        %s702 = ssub.s32 %s42, 1
        %s703 = sand.u32 %s69, 1
        %s704 = scalar_lea.sflag [#allocation5], %s703
        %s705 = sand.u32 %s69, 1
        %s706 = smul.addr %s705, 4
        %s707 = scalar_lea.vmem [#allocation4], %s706
        // Predicated region
        $region97: #{tpu_custom_call.1} parent=95 // pred_check
          %p708 = pneg %p82
        $region98: #{tpu_custom_call.1} parent=95 // pred_check_branch
          %710 = sbr.rel (%p708) target = $region100
        $region99: #{tpu_custom_call.1} parent=95 // pred_region
          %711 = dma.done %s704, 64
        $region100: #{tpu_custom_call.1} parent=95 // pred_fallthru
          _
        %s712 = sand.u32 %s47, 1
        %s713 = scalar_lea.sflag [#allocation8], %s712
        %s714 = sand.u32 %s95, 1
        %s715 = smul.addr %s714, 4
        %s716 = scalar_lea.vmem [#allocation7], %s715
        // Predicated region
        $region101: #{tpu_custom_call.1} parent=95 // pred_check
          %p717 = pneg %p108
        $region102: #{tpu_custom_call.1} parent=95 // pred_check_branch
          %719 = sbr.rel (%p717) target = $region104
        $region103: #{tpu_custom_call.1} parent=95 // pred_region
          %720 = dma.done %s713, 64
        $region104: #{tpu_custom_call.1} parent=95 // pred_fallthru
          _
        %s721 = sand.u32 %s47, 1
        %s722 = scalar_lea.sflag [#allocation8], %s721
        %s723 = sand.u32 %s121, 1
        %s724 = smul.addr %s723, 4
        %s725 = scalar_lea.vmem [#allocation9], %s724
        // Predicated region
        $region105: #{tpu_custom_call.1} parent=95 // pred_check
          %p726 = pneg %p134
        $region106: #{tpu_custom_call.1} parent=95 // pred_check_branch
          %728 = sbr.rel (%p726) target = $region108
        $region107: #{tpu_custom_call.1} parent=95 // pred_region
          %729 = dma.done %s722, 64
        $region108: #{tpu_custom_call.1} parent=95 // pred_fallthru
          _
        // Predicated region
        $region109: #{tpu_custom_call.1} parent=95 // pred_check
          %p730 = pneg %p218
        $region110: #{tpu_custom_call.1} parent=95 // pred_check_branch
          %732 = sbr.rel (%p730) target = $region112
        $region111: #{tpu_custom_call.1} parent=95 // pred_region
          %733 = dma.done [#allocation11], 16
        $region112: #{tpu_custom_call.1} parent=95 // pred_fallthru
          _
        // Predicated region
        $region113: #{tpu_custom_call.1} parent=95 // pred_check
          %p734 = pneg %p260
        $region114: #{tpu_custom_call.1} parent=95 // pred_check_branch
          %736 = sbr.rel (%p734) target = $region116
        $region115: #{tpu_custom_call.1} parent=95 // pred_region
          %737 = dma.done [#allocation11], 16
        $region116: #{tpu_custom_call.1} parent=95 // pred_fallthru
          _
        // Predicated region
        $region117: #{tpu_custom_call.1} parent=95 // pred_check
          %p738 = pneg %p302
        $region118: #{tpu_custom_call.1} parent=95 // pred_check_branch
          %740 = sbr.rel (%p738) target = $region120
        $region119: #{tpu_custom_call.1} parent=95 // pred_region
          %741 = dma.done [#allocation14], 16
        $region120: #{tpu_custom_call.1} parent=95 // pred_fallthru
          _
        // Predicated region
        $region121: #{tpu_custom_call.1} parent=95 // pred_check
          %p742 = pneg %p323
        $region122: #{tpu_custom_call.1} parent=95 // pred_check_branch
          %744 = sbr.rel (%p742) target = $region124
        $region123: #{tpu_custom_call.1} parent=95 // pred_region
          %745 = dma.done [#allocation14], 16
        $region124: #{tpu_custom_call.1} parent=95 // pred_fallthru
          _
        // Predicated region
        $region125: #{tpu_custom_call.1} parent=95 // pred_check
          %p746 = pneg %p344
        $region126: #{tpu_custom_call.1} parent=95 // pred_check_branch
          %748 = sbr.rel (%p746) target = $region128
        $region127: #{tpu_custom_call.1} parent=95 // pred_region
          %749 = dma.done [#allocation17], 16
        $region128: #{tpu_custom_call.1} parent=95 // pred_fallthru
          _
        // Predicated region
        $region129: #{tpu_custom_call.1} parent=95 // pred_check
          %p750 = pneg %p365
        $region130: #{tpu_custom_call.1} parent=95 // pred_check_branch
          %752 = sbr.rel (%p750) target = $region132
        $region131: #{tpu_custom_call.1} parent=95 // pred_region
          %753 = dma.done [#allocation17], 16
        $region132: #{tpu_custom_call.1} parent=95 // pred_fallthru
          _
        %s754 = sand.u32 %s69, 1
        %s755 = scalar_lea.sflag [#allocation5], %s754
        %s756 = sand.u32 %s69, 1
        %s757 = smul.addr %s756, 4
        %s758 = scalar_lea.vmem [#allocation4], %s757
        %p759 = pneg %p82
        %p760 = pneg %p79
        %s761 = sand.u32 %s47, 1
        %s762 = scalar_lea.sflag [#allocation8], %s761
        %s763 = sand.u32 %s95, 1
        %s764 = smul.addr %s763, 4
        %s765 = scalar_lea.vmem [#allocation7], %s764
        %p766 = pneg %p108
        %p767 = pneg %p105
        %s768 = sand.u32 %s47, 1
        %s769 = scalar_lea.sflag [#allocation8], %s768
        %s770 = sand.u32 %s121, 1
        %s771 = smul.addr %s770, 4
        %s772 = scalar_lea.vmem [#allocation9], %s771
        %p773 = pneg %p134
        %p774 = pneg %p131
        %p775 = pneg %p155
        %p776 = pneg %p152
        %p777 = pneg %p176
        %p778 = pneg %p173
        %p779 = pneg %p197
        %p780 = pneg %p194
        %p781 = pneg %p218
        %p782 = pneg %p215
        %p783 = pneg %p239
        %p784 = pneg %p236
        %p785 = pneg %p260
        %p786 = pneg %p257
        %p787 = pneg %p281
        %p788 = pneg %p278
        %p789 = pneg %p302
        %p790 = pneg %p299
        %p791 = pneg %p323
        %p792 = pneg %p320
        %p793 = pneg %p344
        %p794 = pneg %p341
        %p795 = pneg %p365
        %p796 = pneg %p362
        %p797 = pneg %p386
        %p798 = pneg %p383
        %p799 = pneg %p407
        %p800 = pneg %p404
        %p801 = pneg %p428
        %p802 = pneg %p425
        %p803 = pneg %p449
        %p804 = pneg %p446
        %p805 = pneg %p470
        %p806 = pneg %p467
        %p807 = pneg %p498
        %p808 = pneg %p495
        %s809 = sand.u32 %s485, 1
        %s810 = scalar_lea.sflag [#allocation6], %s809
        %s811 = sand.u32 %s485, 1
        %s812 = smul.addr %s811, 8
        %s813 = scalar_lea.vmem [#allocation19], %s812
        %p814 = pneg %p526
        %p815 = pneg %p523
        %s816 = sand.u32 %s513, 1
        %s817 = scalar_lea.sflag [#allocation21], %s816
        %s818 = sand.u32 %s513, 1
        %s819 = smul.addr %s818, 32
        %s820 = scalar_lea.vmem [#allocation20], %s819
        %v822 = vld [vmem:[%s707] sm:$0xf]
        %p823 = scmp.eq.s32.totalorder %s52, 0
        // Predicated region
        $region133: #{tpu_custom_call.1} parent=95 // pred_check
          %p824 = pneg %p823
        $region134: #{tpu_custom_call.1} parent=95 // pred_check_branch
          %826 = sbr.rel (%p824) target = $region136
        $region135: #{tpu_custom_call.1} parent=95 // pred_region
          %v827 = vld [vmem:[%s716] sm:$0xf]
          %v828 = vld [vmem:[%s725] sm:$0xf]
          %v829 = vld [vmem:[%s5] sm:$0xf]
          %v830 = vld [vmem:[%s5 + $0x4] sm:$0xf]
          %v831 = vld [vmem:[%s5 + $0x8] sm:$0xf]
          %v832 = vld [vmem:[%s5 + $0xc] sm:$0xf]
          %v833 = vld [vmem:[#allocation10] sm:$0x1]
          %v835 = vlaneseq
          %v836 = vshrl.u32 %v835, 7
          %v837 = vsub.s32 0, %v836
          %v838 = vrot.slane %v833, %v837
          %v844 = vunpack.c.l.b16 %v829
          %v845 = vunpack.c.l.b16 %v830
          %v846 = vunpack.c.l.b16 %v831
          %v847 = vunpack.c.l.b16 %v832
          %v848 = vpack.c.b16 %v845, %v844
          %v849 = vpack.c.b16 %v847, %v846
          %vm852 = vcmask 261120
          %v854 = vsel %vm852, %v827, 0
          %856 = vmatprep.subr.bf16.mxu0 0
          %857 = vmatpush1.bf16.msra.mxu0 %v848
          %858 = vmatprep.subr.bf16.mxu0 0
          %859 = vmatpush1.bf16.msra.mxu0 %v849
          %860 = vmatprep.subr.bf16.mxu0 0
          %861 = vmatpush1.bf16.msra.mxu0 0
          %862 = vmatprep.subr.bf16.mxu0 0
          %863 = vmatpush1.bf16.msra.mxu0 0
          %864 = vmatprep.subr.bf16.mxu0 0
          %865 = vmatpush1.bf16.msra.mxu0 0
          %866 = vmatprep.subr.bf16.mxu0 0
          %867 = vmatpush1.bf16.msra.mxu0 0
          %868 = vmatprep.subr.bf16.mxu0 0
          %869 = vmatpush1.bf16.msra.mxu0 0
          %870 = vmatprep.subr.bf16.mxu0 0
          %871 = vmatpush1.bf16.msra.mxu0 0
          %872 = vmatprep.subr.bf16.mxu0 0
          %873 = vmatpush1.bf16.msra.mxu0 0
          %874 = vmatprep.subr.bf16.mxu0 0
          %875 = vmatpush1.bf16.msra.mxu0 0
          %876 = vmatprep.subr.bf16.mxu0 0
          %877 = vmatpush1.bf16.msra.mxu0 0
          %878 = vmatprep.subr.bf16.mxu0 0
          %879 = vmatpush1.bf16.msra.mxu0 0
          %880 = vmatprep.subr.bf16.mxu0 0
          %881 = vmatpush1.bf16.msra.mxu0 0
          %882 = vmatprep.subr.bf16.mxu0 0
          %883 = vmatpush1.bf16.msra.mxu0 0
          %884 = vmatprep.subr.bf16.mxu0 0
          %885 = vmatpush1.bf16.msra.mxu0 0
          %886 = vmatprep.subr.bf16.mxu0 0
          %887 = vmatpush1.bf16.msra.mxu0 0
          %888 = vmatprep.mubr.bf16.mxu0 0
          %889 = vmatmul.mubr.bf16.gmra.mrb[0].mxu0 %v854
          %v890 = vpop.f32.mrb[0].mxu0
          %v891 = vadd.f32 %v838, %v890
          %v892 = vpop.f32.mrb[0].mxu0
          %v893 = vpop.f32.mrb[0].mxu0
          %v894 = vpop.f32.mrb[0].mxu0
          %895 = vdwg.mxu0
          %v896 = vld [vmem:[%s7] sm:$0xf]
          %v897 = vld [vmem:[%s7 + $0x4] sm:$0xf]
          %v898 = vld [vmem:[%s7 + $0x8] sm:$0xf]
          %v899 = vld [vmem:[%s7 + $0xc] sm:$0xf]
          %v900 = vld [vmem:[#allocation12] sm:$0x1]
          %v902 = vlaneseq
          %v903 = vshrl.u32 %v902, 7
          %v904 = vsub.s32 0, %v903
          %v905 = vrot.slane %v900, %v904
          %v911 = vunpack.c.l.b16 %v896
          %v912 = vunpack.c.l.b16 %v897
          %v913 = vunpack.c.l.b16 %v898
          %v914 = vunpack.c.l.b16 %v899
          %v915 = vpack.c.b16 %v912, %v911
          %v916 = vpack.c.b16 %v914, %v913
          %v920 = vsel %vm852, %v828, 0
          %922 = vmatprep.subr.bf16.mxu0 0
          %923 = vmatpush1.bf16.msra.mxu0 %v915
          %924 = vmatprep.subr.bf16.mxu0 0
          %925 = vmatpush1.bf16.msra.mxu0 %v916
          %926 = vmatprep.subr.bf16.mxu0 0
          %927 = vmatpush1.bf16.msra.mxu0 0
          %928 = vmatprep.subr.bf16.mxu0 0
          %929 = vmatpush1.bf16.msra.mxu0 0
          %930 = vmatprep.subr.bf16.mxu0 0
          %931 = vmatpush1.bf16.msra.mxu0 0
          %932 = vmatprep.subr.bf16.mxu0 0
          %933 = vmatpush1.bf16.msra.mxu0 0
          %934 = vmatprep.subr.bf16.mxu0 0
          %935 = vmatpush1.bf16.msra.mxu0 0
          %936 = vmatprep.subr.bf16.mxu0 0
          %937 = vmatpush1.bf16.msra.mxu0 0
          %938 = vmatprep.subr.bf16.mxu0 0
          %939 = vmatpush1.bf16.msra.mxu0 0
          %940 = vmatprep.subr.bf16.mxu0 0
          %941 = vmatpush1.bf16.msra.mxu0 0
          %942 = vmatprep.subr.bf16.mxu0 0
          %943 = vmatpush1.bf16.msra.mxu0 0
          %944 = vmatprep.subr.bf16.mxu0 0
          %945 = vmatpush1.bf16.msra.mxu0 0
          %946 = vmatprep.subr.bf16.mxu0 0
          %947 = vmatpush1.bf16.msra.mxu0 0
          %948 = vmatprep.subr.bf16.mxu0 0
          %949 = vmatpush1.bf16.msra.mxu0 0
          %950 = vmatprep.subr.bf16.mxu0 0
          %951 = vmatpush1.bf16.msra.mxu0 0
          %952 = vmatprep.subr.bf16.mxu0 0
          %953 = vmatpush1.bf16.msra.mxu0 0
          %954 = vmatprep.mubr.bf16.mxu0 0
          %955 = vmatmul.mubr.bf16.gmra.mrb[0].mxu0 %v920
          %v956 = vpop.f32.mrb[0].mxu0
          %v957 = vadd.f32 %v905, %v956
          %v958 = vpop.f32.mrb[0].mxu0
          %v959 = vpop.f32.mrb[0].mxu0
          %v960 = vpop.f32.mrb[0].mxu0
          %961 = vdwg.mxu0
          %v962 = vpack.c.bf16 %v891, %v891
          %vm963 = vcmask 257024
          %964 = vst.msk [vmem:[#allocation2] sm:$0xf] %vm963, %v962
          %v965 = vpack.c.bf16 %v957, %v957
          %966 = vst.msk [vmem:[#allocation3] sm:$0xf] %vm963, %v965
        $region136: #{tpu_custom_call.1} parent=95 // pred_fallthru
          _
        %v967 = vld [vmem:[%s3] sm:$0xf]
        %v968 = vld [vmem:[%s3 + $0x4] sm:$0xf]
        %v969 = vld [vmem:[%s3 + $0x8] sm:$0xf]
        %v970 = vld [vmem:[%s3 + $0xc] sm:$0xf]
        %v971 = vld [vmem:[%s4] sm:$0x1]
        %v973 = vlaneseq
        %v974 = vshrl.u32 %v973, 7
        %v975 = vsub.s32 0, %v974
        %v976 = vrot.slane %v971, %v975
        %v982 = vunpack.c.l.b16 %v967
        %v983 = vunpack.c.l.b16 %v968
        %v984 = vunpack.c.l.b16 %v969
        %v985 = vunpack.c.l.b16 %v970
        %v986 = vpack.c.b16 %v983, %v982
        %v987 = vpack.c.b16 %v985, %v984
        %vm990 = vcmask 261120
        %v992 = vsel %vm990, %v822, 0
        %994 = vmatprep.subr.bf16.mxu0 0
        %995 = vmatpush1.bf16.msra.mxu0 %v986
        %996 = vmatprep.subr.bf16.mxu0 0
        %997 = vmatpush1.bf16.msra.mxu0 %v987
        %998 = vmatprep.subr.bf16.mxu0 0
        %999 = vmatpush1.bf16.msra.mxu0 0
        %1000 = vmatprep.subr.bf16.mxu0 0
        %1001 = vmatpush1.bf16.msra.mxu0 0
        %1002 = vmatprep.subr.bf16.mxu0 0
        %1003 = vmatpush1.bf16.msra.mxu0 0
        %1004 = vmatprep.subr.bf16.mxu0 0
        %1005 = vmatpush1.bf16.msra.mxu0 0
        %1006 = vmatprep.subr.bf16.mxu0 0
        %1007 = vmatpush1.bf16.msra.mxu0 0
        %1008 = vmatprep.subr.bf16.mxu0 0
        %1009 = vmatpush1.bf16.msra.mxu0 0
        %1010 = vmatprep.subr.bf16.mxu0 0
        %1011 = vmatpush1.bf16.msra.mxu0 0
        %1012 = vmatprep.subr.bf16.mxu0 0
        %1013 = vmatpush1.bf16.msra.mxu0 0
        %1014 = vmatprep.subr.bf16.mxu0 0
        %1015 = vmatpush1.bf16.msra.mxu0 0
        %1016 = vmatprep.subr.bf16.mxu0 0
        %1017 = vmatpush1.bf16.msra.mxu0 0
        %1018 = vmatprep.subr.bf16.mxu0 0
        %1019 = vmatpush1.bf16.msra.mxu0 0
        %1020 = vmatprep.subr.bf16.mxu0 0
        %1021 = vmatpush1.bf16.msra.mxu0 0
        %1022 = vmatprep.subr.bf16.mxu0 0
        %1023 = vmatpush1.bf16.msra.mxu0 0
        %1024 = vmatprep.subr.bf16.mxu0 0
        %1025 = vmatpush1.bf16.msra.mxu0 0
        %1026 = vmatprep.mubr.bf16.mxu0 0
        %1027 = vmatmul.mubr.bf16.gmra.mrb[0].mxu0 %v992
        %v1028 = vpop.f32.mrb[0].mxu0
        %v1029 = vadd.f32 %v976, %v1028
        %v1030 = vpop.f32.mrb[0].mxu0
        %v1031 = vpop.f32.mrb[0].mxu0
        %v1032 = vpop.f32.mrb[0].mxu0
        %1033 = vdwg.mxu0
        %1035 = vrot.lane.b32.xlu0 %v1029, 120
        %v1036 = vpop.permute.xlu0 %1035
        %1038 = vrot.lane.b32.xlu0 %v1029, 112
        %v1039 = vpop.permute.xlu0 %1038
        %1041 = vrot.lane.b32.xlu0 %v1029, 104
        %v1042 = vpop.permute.xlu0 %1041
        %v1044 = vcombine.low %v1029, %v1039
        %v1045 = vcombine.high %v1029, %v1039
        %v1047 = vunpack.c.l.s4 1983009808
        %v1048 = vunpack.c.0.s8 %v1047
        %v1049 = vlaneseq
        %v1050 = vshrl.u32 %v1049, 7
        %v1051 = vsub.s32 %v1048, %v1050
        %v1052 = vrot.slane %v1044, %v1051
        %v1054 = vunpack.c.l.s4 1983009808
        %v1055 = vunpack.c.0.s8 %v1054
        %v1056 = vlaneseq
        %v1057 = vshrl.u32 %v1056, 7
        %v1058 = vsub.s32 %v1055, %v1057
        %v1059 = vrot.slane %v1045, %v1058
        %v1060 = vcombine.low %v1036, %v1042
        %v1061 = vcombine.high %v1036, %v1042
        %v1063 = vunpack.c.l.s4 1983009808
        %v1064 = vunpack.c.0.s8 %v1063
        %v1065 = vlaneseq
        %v1066 = vshrl.u32 %v1065, 7
        %v1067 = vsub.s32 %v1064, %v1066
        %v1068 = vrot.slane %v1060, %v1067
        %v1070 = vunpack.c.l.s4 1983009808
        %v1071 = vunpack.c.0.s8 %v1070
        %v1072 = vlaneseq
        %v1073 = vshrl.u32 %v1072, 7
        %v1074 = vsub.s32 %v1071, %v1073
        %v1075 = vrot.slane %v1061, %v1074
        %v1076 = vcombine.low %v1052, %v1068
        %v1077 = vcombine.high %v1052, %v1068
        %v1079 = vunpack.c.l.s4 1934713408
        %v1080 = vunpack.c.0.s8 %v1079
        %v1081 = vlaneseq
        %v1082 = vshrl.u32 %v1081, 7
        %v1083 = vsub.s32 %v1080, %v1082
        %v1084 = vrot.slane %v1076, %v1083
        %v1086 = vunpack.c.l.s4 1934713408
        %v1087 = vunpack.c.0.s8 %v1086
        %v1088 = vlaneseq
        %v1089 = vshrl.u32 %v1088, 7
        %v1090 = vsub.s32 %v1087, %v1089
        %v1091 = vrot.slane %v1077, %v1090
        %v1092 = vcombine.low %v1059, %v1075
        %v1093 = vcombine.high %v1059, %v1075
        %v1095 = vunpack.c.l.s4 1934713408
        %v1096 = vunpack.c.0.s8 %v1095
        %v1097 = vlaneseq
        %v1098 = vshrl.u32 %v1097, 7
        %v1099 = vsub.s32 %v1096, %v1098
        %v1100 = vrot.slane %v1092, %v1099
        %v1102 = vunpack.c.l.s4 1934713408
        %v1103 = vunpack.c.0.s8 %v1102
        %v1104 = vlaneseq
        %v1105 = vshrl.u32 %v1104, 7
        %v1106 = vsub.s32 %v1103, %v1105
        %v1107 = vrot.slane %v1093, %v1106
        %v1108 = vcombine.high %v1084, 0.0
        %v1109 = vcombine.high %v1091, 0.0
        %v1110 = vcombine.high %v1100, 0.0
        %v1111 = vcombine.high %v1107, 0.0
        %v1112 = vpack.c.bf16 %v1084, %v1084
        %v1113 = vpack.c.bf16 %v1108, %v1108
        %v1114 = vpack.c.bf16 %v1091, %v1091
        %v1115 = vpack.c.bf16 %v1109, %v1109
        %v1116 = vpack.c.bf16 %v1100, %v1100
        %v1117 = vpack.c.bf16 %v1110, %v1110
        %v1118 = vpack.c.bf16 %v1107, %v1107
        %v1119 = vpack.c.bf16 %v1111, %v1111
        %v1120 = vld [vmem:[#allocation2] sm:$0xf]
        %1122 = vrot.lane.b32.xlu0 %v1120, 120
        %v1123 = vpop.permute.xlu0 %1122
        %1125 = vrot.lane.b32.xlu0 %v1120, 112
        %v1126 = vpop.permute.xlu0 %1125
        %1128 = vrot.lane.b32.xlu0 %v1120, 104
        %v1129 = vpop.permute.xlu0 %1128
        %v1131 = vld [vmem:[#allocation3] sm:$0xf]
        %1133 = vrot.lane.b32.xlu0 %v1131, 120
        %v1134 = vpop.permute.xlu0 %1133
        %1136 = vrot.lane.b32.xlu0 %v1131, 112
        %v1137 = vpop.permute.xlu0 %1136
        %1139 = vrot.lane.b32.xlu0 %v1131, 104
        %v1140 = vpop.permute.xlu0 %1139
        %v1142 = vcombine.low %v1112, %v1116
        %v1144 = vunpack.c.l.s4 1983009808
        %v1145 = vunpack.c.0.s8 %v1144
        %v1146 = vlaneseq
        %v1147 = vshrl.u32 %v1146, 7
        %v1148 = vsub.s32 %v1145, %v1147
        %v1149 = vrot.slane %v1142, %v1148
        %v1150 = vcombine.low %v1114, %v1118
        %v1152 = vunpack.c.l.s4 1983009808
        %v1153 = vunpack.c.0.s8 %v1152
        %v1154 = vlaneseq
        %v1155 = vshrl.u32 %v1154, 7
        %v1156 = vsub.s32 %v1153, %v1155
        %v1157 = vrot.slane %v1150, %v1156
        %v1158 = vcombine.low %v1149, %v1157
        %v1160 = vunpack.c.l.s4 1934713408
        %v1161 = vunpack.c.0.s8 %v1160
        %v1162 = vlaneseq
        %v1163 = vshrl.u32 %v1162, 7
        %v1164 = vsub.s32 %v1161, %v1163
        %v1165 = vrot.slane %v1158, %v1164
        %v1166 = vcombine.high %v1165, 0
        %v1167 = vcombine.low %v1113, %v1117
        %v1169 = vunpack.c.l.s4 1983009808
        %v1170 = vunpack.c.0.s8 %v1169
        %v1171 = vlaneseq
        %v1172 = vshrl.u32 %v1171, 7
        %v1173 = vsub.s32 %v1170, %v1172
        %v1174 = vrot.slane %v1167, %v1173
        %v1175 = vcombine.low %v1115, %v1119
        %v1177 = vunpack.c.l.s4 1983009808
        %v1178 = vunpack.c.0.s8 %v1177
        %v1179 = vlaneseq
        %v1180 = vshrl.u32 %v1179, 7
        %v1181 = vsub.s32 %v1178, %v1180
        %v1182 = vrot.slane %v1175, %v1181
        %v1183 = vcombine.low %v1174, %v1182
        %v1185 = vunpack.c.l.s4 1934713408
        %v1186 = vunpack.c.0.s8 %v1185
        %v1187 = vlaneseq
        %v1188 = vshrl.u32 %v1187, 7
        %v1189 = vsub.s32 %v1186, %v1188
        %v1190 = vrot.slane %v1183, %v1189
        %v1191 = vcombine.high %v1190, 0
        %v1194 = vpack.i.b16 %v1190, %v1165
        %v1195 = vshrl.u32 %v1165, 16
        %v1196 = vshrl.u32 %v1190, 16
        %v1197 = vpack.i.b16 %v1196, %v1195
        %v1200 = vpack.i.b16 %v1191, %v1166
        %v1201 = vshrl.u32 %v1166, 16
        %v1202 = vshrl.u32 %v1191, 16
        %v1203 = vpack.i.b16 %v1202, %v1201
        %1204 = vxpose.xlu0.c.b16.start [1/8] %v1120, 128
        %1205 = vxpose.xlu0.c.b16.cont [2/8] 0, 128
        %1206 = vxpose.xlu0.c.b16.cont [3/8] 0, 128
        %1207 = vxpose.xlu0.c.b16.cont [4/8] 0, 128
        %1208 = vxpose.xlu0.c.b16.cont [5/8] 0, 128
        %1209 = vxpose.xlu0.c.b16.cont [6/8] 0, 128
        %1210 = vxpose.xlu0.c.b16.cont [7/8] 0, 128
        %1211 = vxpose.xlu0.c.b16.end [8/8] 0, 128
        %v1212 = vpop.trf.xlu0
        %v1213 = vpop.trf.xlu0
        %v1214 = vpop.trf.xlu0
        %v1215 = vpop.trf.xlu0
        %v1216 = vpop.trf.xlu0
        %v1217 = vpop.trf.xlu0
        %v1218 = vpop.trf.xlu0
        %v1219 = vpop.trf.xlu0
        %1220 = vxpose.xlu0.c.b16.start [1/8] %v1123, 128
        %1221 = vxpose.xlu0.c.b16.cont [2/8] 0, 128
        %1222 = vxpose.xlu0.c.b16.cont [3/8] 0, 128
        %1223 = vxpose.xlu0.c.b16.cont [4/8] 0, 128
        %1224 = vxpose.xlu0.c.b16.cont [5/8] 0, 128
        %1225 = vxpose.xlu0.c.b16.cont [6/8] 0, 128
        %1226 = vxpose.xlu0.c.b16.cont [7/8] 0, 128
        %1227 = vxpose.xlu0.c.b16.end [8/8] 0, 128
        %v1228 = vpop.trf.xlu0
        %v1229 = vpop.trf.xlu0
        %v1230 = vpop.trf.xlu0
        %v1231 = vpop.trf.xlu0
        %v1232 = vpop.trf.xlu0
        %v1233 = vpop.trf.xlu0
        %v1234 = vpop.trf.xlu0
        %v1235 = vpop.trf.xlu0
        %1236 = vxpose.xlu0.c.b16.start [1/8] %v1126, 128
        %1237 = vxpose.xlu0.c.b16.cont [2/8] 0, 128
        %1238 = vxpose.xlu0.c.b16.cont [3/8] 0, 128
        %1239 = vxpose.xlu0.c.b16.cont [4/8] 0, 128
        %1240 = vxpose.xlu0.c.b16.cont [5/8] 0, 128
        %1241 = vxpose.xlu0.c.b16.cont [6/8] 0, 128
        %1242 = vxpose.xlu0.c.b16.cont [7/8] 0, 128
        %1243 = vxpose.xlu0.c.b16.end [8/8] 0, 128
        %v1244 = vpop.trf.xlu0
        %v1245 = vpop.trf.xlu0
        %v1246 = vpop.trf.xlu0
        %v1247 = vpop.trf.xlu0
        %v1248 = vpop.trf.xlu0
        %v1249 = vpop.trf.xlu0
        %v1250 = vpop.trf.xlu0
        %v1251 = vpop.trf.xlu0
        %1252 = vxpose.xlu0.c.b16.start [1/8] %v1129, 128
        %1253 = vxpose.xlu0.c.b16.cont [2/8] 0, 128
        %1254 = vxpose.xlu0.c.b16.cont [3/8] 0, 128
        %1255 = vxpose.xlu0.c.b16.cont [4/8] 0, 128
        %1256 = vxpose.xlu0.c.b16.cont [5/8] 0, 128
        %1257 = vxpose.xlu0.c.b16.cont [6/8] 0, 128
        %1258 = vxpose.xlu0.c.b16.cont [7/8] 0, 128
        %1259 = vxpose.xlu0.c.b16.end [8/8] 0, 128
        %v1260 = vpop.trf.xlu0
        %v1261 = vpop.trf.xlu0
        %v1262 = vpop.trf.xlu0
        %v1263 = vpop.trf.xlu0
        %v1264 = vpop.trf.xlu0
        %v1265 = vpop.trf.xlu0
        %v1266 = vpop.trf.xlu0
        %v1267 = vpop.trf.xlu0
        %vm1268 = vcmask 64512
        %v1270 = vsel %vm1268, %v1194, 0
        %vm1272 = vcmask 1043456
        %v1274 = vsel %vm1272, %v1212, 0
        %1276 = vmatprep.subr.bf16.mxu0 0
        %1277 = vmatpush1.bf16.msra.mxu0 %v1274
        %1278 = vmatprep.subr.bf16.mxu0 0
        %1279 = vmatpush1.bf16.msra.mxu0 0
        %1280 = vmatprep.subr.bf16.mxu0 0
        %1281 = vmatpush1.bf16.msra.mxu0 0
        %1282 = vmatprep.subr.bf16.mxu0 0
        %1283 = vmatpush1.bf16.msra.mxu0 0
        %1284 = vmatprep.subr.bf16.mxu0 0
        %1285 = vmatpush1.bf16.msra.mxu0 0
        %1286 = vmatprep.subr.bf16.mxu0 0
        %1287 = vmatpush1.bf16.msra.mxu0 0
        %1288 = vmatprep.subr.bf16.mxu0 0
        %1289 = vmatpush1.bf16.msra.mxu0 0
        %1290 = vmatprep.subr.bf16.mxu0 0
        %1291 = vmatpush1.bf16.msra.mxu0 0
        %1292 = vmatprep.subr.bf16.mxu0 0
        %1293 = vmatpush1.bf16.msra.mxu0 0
        %1294 = vmatprep.subr.bf16.mxu0 0
        %1295 = vmatpush1.bf16.msra.mxu0 0
        %1296 = vmatprep.subr.bf16.mxu0 0
        %1297 = vmatpush1.bf16.msra.mxu0 0
        %1298 = vmatprep.subr.bf16.mxu0 0
        %1299 = vmatpush1.bf16.msra.mxu0 0
        %1300 = vmatprep.subr.bf16.mxu0 0
        %1301 = vmatpush1.bf16.msra.mxu0 0
        %1302 = vmatprep.subr.bf16.mxu0 0
        %1303 = vmatpush1.bf16.msra.mxu0 0
        %1304 = vmatprep.subr.bf16.mxu0 0
        %1305 = vmatpush1.bf16.msra.mxu0 0
        %1306 = vmatprep.subr.bf16.mxu0 0
        %1307 = vmatpush1.bf16.msra.mxu0 0
        %1308 = vmatprep.mubr.bf16.mxu0 0
        %1309 = vmatmul.mubr.bf16.gmra.mrb[0].mxu0 %v1270
        %v1310 = vpop.f32.mrb[0].mxu0
        %v1311 = vadd.f32 0.0, %v1310
        %v1312 = vpop.f32.mrb[0].mxu0
        %v1313 = vpop.f32.mrb[0].mxu0
        %v1314 = vpop.f32.mrb[0].mxu0
        %1315 = vdwg.mxu0
        %v1317 = vsel %vm1268, %v1197, 0
        %v1320 = vsel %vm1272, %v1228, 0
        %1322 = vmatprep.subr.bf16.mxu0 0
        %1323 = vmatpush1.bf16.msra.mxu0 %v1320
        %1324 = vmatprep.subr.bf16.mxu0 0
        %1325 = vmatpush1.bf16.msra.mxu0 0
        %1326 = vmatprep.subr.bf16.mxu0 0
        %1327 = vmatpush1.bf16.msra.mxu0 0
        %1328 = vmatprep.subr.bf16.mxu0 0
        %1329 = vmatpush1.bf16.msra.mxu0 0
        %1330 = vmatprep.subr.bf16.mxu0 0
        %1331 = vmatpush1.bf16.msra.mxu0 0
        %1332 = vmatprep.subr.bf16.mxu0 0
        %1333 = vmatpush1.bf16.msra.mxu0 0
        %1334 = vmatprep.subr.bf16.mxu0 0
        %1335 = vmatpush1.bf16.msra.mxu0 0
        %1336 = vmatprep.subr.bf16.mxu0 0
        %1337 = vmatpush1.bf16.msra.mxu0 0
        %1338 = vmatprep.subr.bf16.mxu0 0
        %1339 = vmatpush1.bf16.msra.mxu0 0
        %1340 = vmatprep.subr.bf16.mxu0 0
        %1341 = vmatpush1.bf16.msra.mxu0 0
        %1342 = vmatprep.subr.bf16.mxu0 0
        %1343 = vmatpush1.bf16.msra.mxu0 0
        %1344 = vmatprep.subr.bf16.mxu0 0
        %1345 = vmatpush1.bf16.msra.mxu0 0
        %1346 = vmatprep.subr.bf16.mxu0 0
        %1347 = vmatpush1.bf16.msra.mxu0 0
        %1348 = vmatprep.subr.bf16.mxu0 0
        %1349 = vmatpush1.bf16.msra.mxu0 0
        %1350 = vmatprep.subr.bf16.mxu0 0
        %1351 = vmatpush1.bf16.msra.mxu0 0
        %1352 = vmatprep.subr.bf16.mxu0 0
        %1353 = vmatpush1.bf16.msra.mxu0 0
        %1354 = vmatprep.mubr.bf16.mxu0 0
        %1355 = vmatmul.mubr.bf16.gmra.mrb[0].mxu0 %v1317
        %v1356 = vpop.f32.mrb[0].mxu0
        %v1357 = vadd.f32 0.0, %v1356
        %v1358 = vpop.f32.mrb[0].mxu0
        %v1359 = vpop.f32.mrb[0].mxu0
        %v1360 = vpop.f32.mrb[0].mxu0
        %1361 = vdwg.mxu0
        %v1363 = vsel %vm1268, %v1200, 0
        %v1366 = vsel %vm1272, %v1244, 0
        %1368 = vmatprep.subr.bf16.mxu0 0
        %1369 = vmatpush1.bf16.msra.mxu0 %v1366
        %1370 = vmatprep.subr.bf16.mxu0 0
        %1371 = vmatpush1.bf16.msra.mxu0 0
        %1372 = vmatprep.subr.bf16.mxu0 0
        %1373 = vmatpush1.bf16.msra.mxu0 0
        %1374 = vmatprep.subr.bf16.mxu0 0
        %1375 = vmatpush1.bf16.msra.mxu0 0
        %1376 = vmatprep.subr.bf16.mxu0 0
        %1377 = vmatpush1.bf16.msra.mxu0 0
        %1378 = vmatprep.subr.bf16.mxu0 0
        %1379 = vmatpush1.bf16.msra.mxu0 0
        %1380 = vmatprep.subr.bf16.mxu0 0
        %1381 = vmatpush1.bf16.msra.mxu0 0
        %1382 = vmatprep.subr.bf16.mxu0 0
        %1383 = vmatpush1.bf16.msra.mxu0 0
        %1384 = vmatprep.subr.bf16.mxu0 0
        %1385 = vmatpush1.bf16.msra.mxu0 0
        %1386 = vmatprep.subr.bf16.mxu0 0
        %1387 = vmatpush1.bf16.msra.mxu0 0
        %1388 = vmatprep.subr.bf16.mxu0 0
        %1389 = vmatpush1.bf16.msra.mxu0 0
        %1390 = vmatprep.subr.bf16.mxu0 0
        %1391 = vmatpush1.bf16.msra.mxu0 0
        %1392 = vmatprep.subr.bf16.mxu0 0
        %1393 = vmatpush1.bf16.msra.mxu0 0
        %1394 = vmatprep.subr.bf16.mxu0 0
        %1395 = vmatpush1.bf16.msra.mxu0 0
        %1396 = vmatprep.subr.bf16.mxu0 0
        %1397 = vmatpush1.bf16.msra.mxu0 0
        %1398 = vmatprep.subr.bf16.mxu0 0
        %1399 = vmatpush1.bf16.msra.mxu0 0
        %1400 = vmatprep.mubr.bf16.mxu0 0
        %1401 = vmatmul.mubr.bf16.gmra.mrb[0].mxu0 %v1363
        %v1402 = vpop.f32.mrb[0].mxu0
        %v1403 = vadd.f32 0.0, %v1402
        %v1404 = vpop.f32.mrb[0].mxu0
        %v1405 = vpop.f32.mrb[0].mxu0
        %v1406 = vpop.f32.mrb[0].mxu0
        %1407 = vdwg.mxu0
        %v1409 = vsel %vm1268, %v1203, 0
        %v1412 = vsel %vm1272, %v1260, 0
        %1414 = vmatprep.subr.bf16.mxu0 0
        %1415 = vmatpush1.bf16.msra.mxu0 %v1412
        %1416 = vmatprep.subr.bf16.mxu0 0
        %1417 = vmatpush1.bf16.msra.mxu0 0
        %1418 = vmatprep.subr.bf16.mxu0 0
        %1419 = vmatpush1.bf16.msra.mxu0 0
        %1420 = vmatprep.subr.bf16.mxu0 0
        %1421 = vmatpush1.bf16.msra.mxu0 0
        %1422 = vmatprep.subr.bf16.mxu0 0
        %1423 = vmatpush1.bf16.msra.mxu0 0
        %1424 = vmatprep.subr.bf16.mxu0 0
        %1425 = vmatpush1.bf16.msra.mxu0 0
        %1426 = vmatprep.subr.bf16.mxu0 0
        %1427 = vmatpush1.bf16.msra.mxu0 0
        %1428 = vmatprep.subr.bf16.mxu0 0
        %1429 = vmatpush1.bf16.msra.mxu0 0
        %1430 = vmatprep.subr.bf16.mxu0 0
        %1431 = vmatpush1.bf16.msra.mxu0 0
        %1432 = vmatprep.subr.bf16.mxu0 0
        %1433 = vmatpush1.bf16.msra.mxu0 0
        %1434 = vmatprep.subr.bf16.mxu0 0
        %1435 = vmatpush1.bf16.msra.mxu0 0
        %1436 = vmatprep.subr.bf16.mxu0 0
        %1437 = vmatpush1.bf16.msra.mxu0 0
        %1438 = vmatprep.subr.bf16.mxu0 0
        %1439 = vmatpush1.bf16.msra.mxu0 0
        %1440 = vmatprep.subr.bf16.mxu0 0
        %1441 = vmatpush1.bf16.msra.mxu0 0
        %1442 = vmatprep.subr.bf16.mxu0 0
        %1443 = vmatpush1.bf16.msra.mxu0 0
        %1444 = vmatprep.subr.bf16.mxu0 0
        %1445 = vmatpush1.bf16.msra.mxu0 0
        %1446 = vmatprep.mubr.bf16.mxu0 0
        %1447 = vmatmul.mubr.bf16.gmra.mrb[0].mxu0 %v1409
        %v1448 = vpop.f32.mrb[0].mxu0
        %v1449 = vadd.f32 0.0, %v1448
        %v1450 = vpop.f32.mrb[0].mxu0
        %v1451 = vpop.f32.mrb[0].mxu0
        %v1452 = vpop.f32.mrb[0].mxu0
        %1453 = vdwg.mxu0
        %s1454 = smul.u32 %s52, 8
        %v1455 = vlaneseq
        %v1456 = vshrl.u32 %v1455, 7
        %v1457 = vstv %s1454
        %v1458 = vadd.s32 %v1457, %v1456
        %v1459 = vlaneseq
        %v1460 = vand.u32 %v1459, 127
        %vm1461 = vcmp.gt.s32.totalorder %v1460, %v1458
        %v1462 = vsel %vm1461, 1, 0
        %vm1463 = vcmp.eq.s32.totalorder %v1462, 1
        %v1464 = vsel %vm1463, -1e+30, %v1311
        %v1465 = vsel %vm1463, -1e+30, %v1357
        %v1466 = vsel %vm1463, -1e+30, %v1403
        %v1467 = vsel %vm1463, -1e+30, %v1449
        %v1468 = vsel %vm1268, %v1464, -inf
        %1469 = vmax.xlane.f32.xlu0 %v1468
        %v1470 = vpop.xlane.xlu0 %1469
        %v1471 = vsel %vm1268, %v1465, -inf
        %1472 = vmax.xlane.f32.xlu0 %v1471
        %v1473 = vpop.xlane.xlu0 %1472
        %v1474 = vsel %vm1268, %v1466, -inf
        %1475 = vmax.xlane.f32.xlu0 %v1474
        %v1476 = vpop.xlane.xlu0 %1475
        %v1477 = vsel %vm1268, %v1467, -inf
        %1478 = vmax.xlane.f32.xlu0 %v1477
        %v1479 = vpop.xlane.xlu0 %1478
        %v1480 = vsub.f32 %v1464, %v1470
        %v1481 = vsub.f32 %v1465, %v1473
        %v1482 = vsub.f32 %v1466, %v1476
        %v1483 = vsub.f32 %v1467, %v1479
        %v1484 = vmul.f32 %v1480, 1.442695
        %v1485 = vpow.pop %v1484
        %v1486 = vmul.f32 %v1481, 1.442695
        %v1487 = vpow.pop %v1486
        %v1488 = vmul.f32 %v1482, 1.442695
        %v1489 = vpow.pop %v1488
        %v1490 = vmul.f32 %v1483, 1.442695
        %v1491 = vpow.pop %v1490
        %v1492 = vsel %vm1268, %v1485, 0.0
        %1493 = vadd.xlane.f32.xlu0 %v1492
        %v1494 = vpop.xlane.xlu0 %1493
        %v1495 = vsel %vm1268, %v1487, 0.0
        %1496 = vadd.xlane.f32.xlu0 %v1495
        %v1497 = vpop.xlane.xlu0 %1496
        %v1498 = vsel %vm1268, %v1489, 0.0
        %1499 = vadd.xlane.f32.xlu0 %v1498
        %v1500 = vpop.xlane.xlu0 %1499
        %v1501 = vsel %vm1268, %v1491, 0.0
        %1502 = vadd.xlane.f32.xlu0 %v1501
        %v1503 = vpop.xlane.xlu0 %1502
        %v1504 = vrcp.pop %v1494
        %v1505 = vmul.f32 %v1485, %v1504
        %v1506 = vrcp.pop %v1497
        %v1507 = vmul.f32 %v1487, %v1506
        %v1508 = vrcp.pop %v1500
        %v1509 = vmul.f32 %v1489, %v1508
        %v1510 = vrcp.pop %v1503
        %v1511 = vmul.f32 %v1491, %v1510
        %1512 = vst.msk [vmem:[%s820] sm:$0xff] %vm1268, %v1505
        %1513 = vst.msk [vmem:[%s820 + $0x8] sm:$0xff] %vm1268, %v1507
        %1514 = vst.msk [vmem:[%s820 + $0x10] sm:$0xff] %vm1268, %v1509
        %1515 = vst.msk [vmem:[%s820 + $0x18] sm:$0xff] %vm1268, %v1511
        %v1516 = vpack.c.bf16 %v1505, %v1505
        %v1517 = vpack.c.bf16 %v1507, %v1507
        %v1518 = vpack.c.bf16 %v1509, %v1509
        %v1519 = vpack.c.bf16 %v1511, %v1511
        %1520 = vxpose.xlu0.c.b16.start [1/8] %v1131, 128
        %1521 = vxpose.xlu0.c.b16.cont [2/8] 0, 128
        %1522 = vxpose.xlu0.c.b16.cont [3/8] 0, 128
        %1523 = vxpose.xlu0.c.b16.cont [4/8] 0, 128
        %1524 = vxpose.xlu0.c.b16.cont [5/8] 0, 128
        %1525 = vxpose.xlu0.c.b16.cont [6/8] 0, 128
        %1526 = vxpose.xlu0.c.b16.cont [7/8] 0, 128
        %1527 = vxpose.xlu0.c.b16.end [8/8] 0, 128
        %v1528 = vpop.trf.xlu0
        %v1529 = vpop.trf.xlu0
        %v1530 = vpop.trf.xlu0
        %v1531 = vpop.trf.xlu0
        %v1532 = vpop.trf.xlu0
        %v1533 = vpop.trf.xlu0
        %v1534 = vpop.trf.xlu0
        %v1535 = vpop.trf.xlu0
        %1536 = vxpose.xlu0.c.b16.start [1/8] %v1134, 128
        %1537 = vxpose.xlu0.c.b16.cont [2/8] 0, 128
        %1538 = vxpose.xlu0.c.b16.cont [3/8] 0, 128
        %1539 = vxpose.xlu0.c.b16.cont [4/8] 0, 128
        %1540 = vxpose.xlu0.c.b16.cont [5/8] 0, 128
        %1541 = vxpose.xlu0.c.b16.cont [6/8] 0, 128
        %1542 = vxpose.xlu0.c.b16.cont [7/8] 0, 128
        %1543 = vxpose.xlu0.c.b16.end [8/8] 0, 128
        %v1544 = vpop.trf.xlu0
        %v1545 = vpop.trf.xlu0
        %v1546 = vpop.trf.xlu0
        %v1547 = vpop.trf.xlu0
        %v1548 = vpop.trf.xlu0
        %v1549 = vpop.trf.xlu0
        %v1550 = vpop.trf.xlu0
        %v1551 = vpop.trf.xlu0
        %1552 = vxpose.xlu0.c.b16.start [1/8] %v1137, 128
        %1553 = vxpose.xlu0.c.b16.cont [2/8] 0, 128
        %1554 = vxpose.xlu0.c.b16.cont [3/8] 0, 128
        %1555 = vxpose.xlu0.c.b16.cont [4/8] 0, 128
        %1556 = vxpose.xlu0.c.b16.cont [5/8] 0, 128
        %1557 = vxpose.xlu0.c.b16.cont [6/8] 0, 128
        %1558 = vxpose.xlu0.c.b16.cont [7/8] 0, 128
        %1559 = vxpose.xlu0.c.b16.end [8/8] 0, 128
        %v1560 = vpop.trf.xlu0
        %v1561 = vpop.trf.xlu0
        %v1562 = vpop.trf.xlu0
        %v1563 = vpop.trf.xlu0
        %v1564 = vpop.trf.xlu0
        %v1565 = vpop.trf.xlu0
        %v1566 = vpop.trf.xlu0
        %v1567 = vpop.trf.xlu0
        %1568 = vxpose.xlu0.c.b16.start [1/8] %v1140, 128
        %1569 = vxpose.xlu0.c.b16.cont [2/8] 0, 128
        %1570 = vxpose.xlu0.c.b16.cont [3/8] 0, 128
        %1571 = vxpose.xlu0.c.b16.cont [4/8] 0, 128
        %1572 = vxpose.xlu0.c.b16.cont [5/8] 0, 128
        %1573 = vxpose.xlu0.c.b16.cont [6/8] 0, 128
        %1574 = vxpose.xlu0.c.b16.cont [7/8] 0, 128
        %1575 = vxpose.xlu0.c.b16.end [8/8] 0, 128
        %v1576 = vpop.trf.xlu0
        %v1577 = vpop.trf.xlu0
        %v1578 = vpop.trf.xlu0
        %v1579 = vpop.trf.xlu0
        %v1580 = vpop.trf.xlu0
        %v1581 = vpop.trf.xlu0
        %v1582 = vpop.trf.xlu0
        %v1583 = vpop.trf.xlu0
        %v1585 = vsel %vm1268, %v1528, 0
        %v1588 = vsel %vm1268, %v1516, 0
        %1590 = vmatprep.subr.bf16.mxu0 0
        %1591 = vmatpush1.bf16.xpose.msra.mxu0 %v1588
        %1592 = vmatprep.subr.bf16.mxu0 0
        %1593 = vmatpush1.bf16.xpose.msra.mxu0 0
        %1594 = vmatprep.subr.bf16.mxu0 0
        %1595 = vmatpush1.bf16.xpose.msra.mxu0 0
        %1596 = vmatprep.subr.bf16.mxu0 0
        %1597 = vmatpush1.bf16.xpose.msra.mxu0 0
        %1598 = vmatprep.subr.bf16.mxu0 0
        %1599 = vmatpush1.bf16.xpose.msra.mxu0 0
        %1600 = vmatprep.subr.bf16.mxu0 0
        %1601 = vmatpush1.bf16.xpose.msra.mxu0 0
        %1602 = vmatprep.subr.bf16.mxu0 0
        %1603 = vmatpush1.bf16.xpose.msra.mxu0 0
        %1604 = vmatprep.subr.bf16.mxu0 0
        %1605 = vmatpush1.bf16.xpose.msra.mxu0 0
        %1606 = vmatprep.subr.bf16.mxu0 0
        %1607 = vmatpush1.bf16.xpose.msra.mxu0 0
        %1608 = vmatprep.subr.bf16.mxu0 0
        %1609 = vmatpush1.bf16.xpose.msra.mxu0 0
        %1610 = vmatprep.subr.bf16.mxu0 0
        %1611 = vmatpush1.bf16.xpose.msra.mxu0 0
        %1612 = vmatprep.subr.bf16.mxu0 0
        %1613 = vmatpush1.bf16.xpose.msra.mxu0 0
        %1614 = vmatprep.subr.bf16.mxu0 0
        %1615 = vmatpush1.bf16.xpose.msra.mxu0 0
        %1616 = vmatprep.subr.bf16.mxu0 0
        %1617 = vmatpush1.bf16.xpose.msra.mxu0 0
        %1618 = vmatprep.subr.bf16.mxu0 0
        %1619 = vmatpush1.bf16.xpose.msra.mxu0 0
        %1620 = vmatprep.subr.bf16.mxu0 0
        %1621 = vmatpush1.bf16.xpose.msra.mxu0 0
        %1622 = vmatprep.mubr.bf16.mxu0 0
        %1623 = vmatmul.mubr.bf16.gmra.mrb[0].mxu0 %v1585
        %v1624 = vpop.f32.mrb[0].mxu0
        %v1625 = vadd.f32 0.0, %v1624
        %v1626 = vpop.f32.mrb[0].mxu0
        %v1627 = vpop.f32.mrb[0].mxu0
        %v1628 = vpop.f32.mrb[0].mxu0
        %1629 = vdwg.mxu0
        %v1631 = vsel %vm1268, %v1544, 0
        %v1634 = vsel %vm1268, %v1517, 0
        %1636 = vmatprep.subr.bf16.mxu0 0
        %1637 = vmatpush1.bf16.xpose.msra.mxu0 %v1634
        %1638 = vmatprep.subr.bf16.mxu0 0
        %1639 = vmatpush1.bf16.xpose.msra.mxu0 0
        %1640 = vmatprep.subr.bf16.mxu0 0
        %1641 = vmatpush1.bf16.xpose.msra.mxu0 0
        %1642 = vmatprep.subr.bf16.mxu0 0
        %1643 = vmatpush1.bf16.xpose.msra.mxu0 0
        %1644 = vmatprep.subr.bf16.mxu0 0
        %1645 = vmatpush1.bf16.xpose.msra.mxu0 0
        %1646 = vmatprep.subr.bf16.mxu0 0
        %1647 = vmatpush1.bf16.xpose.msra.mxu0 0
        %1648 = vmatprep.subr.bf16.mxu0 0
        %1649 = vmatpush1.bf16.xpose.msra.mxu0 0
        %1650 = vmatprep.subr.bf16.mxu0 0
        %1651 = vmatpush1.bf16.xpose.msra.mxu0 0
        %1652 = vmatprep.subr.bf16.mxu0 0
        %1653 = vmatpush1.bf16.xpose.msra.mxu0 0
        %1654 = vmatprep.subr.bf16.mxu0 0
        %1655 = vmatpush1.bf16.xpose.msra.mxu0 0
        %1656 = vmatprep.subr.bf16.mxu0 0
        %1657 = vmatpush1.bf16.xpose.msra.mxu0 0
        %1658 = vmatprep.subr.bf16.mxu0 0
        %1659 = vmatpush1.bf16.xpose.msra.mxu0 0
        %1660 = vmatprep.subr.bf16.mxu0 0
        %1661 = vmatpush1.bf16.xpose.msra.mxu0 0
        %1662 = vmatprep.subr.bf16.mxu0 0
        %1663 = vmatpush1.bf16.xpose.msra.mxu0 0
        %1664 = vmatprep.subr.bf16.mxu0 0
        %1665 = vmatpush1.bf16.xpose.msra.mxu0 0
        %1666 = vmatprep.subr.bf16.mxu0 0
        %1667 = vmatpush1.bf16.xpose.msra.mxu0 0
        %1668 = vmatprep.mubr.bf16.mxu0 0
        %1669 = vmatmul.mubr.bf16.gmra.mrb[0].mxu0 %v1631
        %v1670 = vpop.f32.mrb[0].mxu0
        %v1671 = vadd.f32 0.0, %v1670
        %v1672 = vpop.f32.mrb[0].mxu0
        %v1673 = vpop.f32.mrb[0].mxu0
        %v1674 = vpop.f32.mrb[0].mxu0
        %1675 = vdwg.mxu0
        %v1677 = vsel %vm1268, %v1560, 0
        %v1680 = vsel %vm1268, %v1518, 0
        %1682 = vmatprep.subr.bf16.mxu0 0
        %1683 = vmatpush1.bf16.xpose.msra.mxu0 %v1680
        %1684 = vmatprep.subr.bf16.mxu0 0
        %1685 = vmatpush1.bf16.xpose.msra.mxu0 0
        %1686 = vmatprep.subr.bf16.mxu0 0
        %1687 = vmatpush1.bf16.xpose.msra.mxu0 0
        %1688 = vmatprep.subr.bf16.mxu0 0
        %1689 = vmatpush1.bf16.xpose.msra.mxu0 0
        %1690 = vmatprep.subr.bf16.mxu0 0
        %1691 = vmatpush1.bf16.xpose.msra.mxu0 0
        %1692 = vmatprep.subr.bf16.mxu0 0
        %1693 = vmatpush1.bf16.xpose.msra.mxu0 0
        %1694 = vmatprep.subr.bf16.mxu0 0
        %1695 = vmatpush1.bf16.xpose.msra.mxu0 0
        %1696 = vmatprep.subr.bf16.mxu0 0
        %1697 = vmatpush1.bf16.xpose.msra.mxu0 0
        %1698 = vmatprep.subr.bf16.mxu0 0
        %1699 = vmatpush1.bf16.xpose.msra.mxu0 0
        %1700 = vmatprep.subr.bf16.mxu0 0
        %1701 = vmatpush1.bf16.xpose.msra.mxu0 0
        %1702 = vmatprep.subr.bf16.mxu0 0
        %1703 = vmatpush1.bf16.xpose.msra.mxu0 0
        %1704 = vmatprep.subr.bf16.mxu0 0
        %1705 = vmatpush1.bf16.xpose.msra.mxu0 0
        %1706 = vmatprep.subr.bf16.mxu0 0
        %1707 = vmatpush1.bf16.xpose.msra.mxu0 0
        %1708 = vmatprep.subr.bf16.mxu0 0
        %1709 = vmatpush1.bf16.xpose.msra.mxu0 0
        %1710 = vmatprep.subr.bf16.mxu0 0
        %1711 = vmatpush1.bf16.xpose.msra.mxu0 0
        %1712 = vmatprep.subr.bf16.mxu0 0
        %1713 = vmatpush1.bf16.xpose.msra.mxu0 0
        %1714 = vmatprep.mubr.bf16.mxu0 0
        %1715 = vmatmul.mubr.bf16.gmra.mrb[0].mxu0 %v1677
        %v1716 = vpop.f32.mrb[0].mxu0
        %v1717 = vadd.f32 0.0, %v1716
        %v1718 = vpop.f32.mrb[0].mxu0
        %v1719 = vpop.f32.mrb[0].mxu0
        %v1720 = vpop.f32.mrb[0].mxu0
        %1721 = vdwg.mxu0
        %v1723 = vsel %vm1268, %v1576, 0
        %v1726 = vsel %vm1268, %v1519, 0
        %1728 = vmatprep.subr.bf16.mxu0 0
        %1729 = vmatpush1.bf16.xpose.msra.mxu0 %v1726
        %1730 = vmatprep.subr.bf16.mxu0 0
        %1731 = vmatpush1.bf16.xpose.msra.mxu0 0
        %1732 = vmatprep.subr.bf16.mxu0 0
        %1733 = vmatpush1.bf16.xpose.msra.mxu0 0
        %1734 = vmatprep.subr.bf16.mxu0 0
        %1735 = vmatpush1.bf16.xpose.msra.mxu0 0
        %1736 = vmatprep.subr.bf16.mxu0 0
        %1737 = vmatpush1.bf16.xpose.msra.mxu0 0
        %1738 = vmatprep.subr.bf16.mxu0 0
        %1739 = vmatpush1.bf16.xpose.msra.mxu0 0
        %1740 = vmatprep.subr.bf16.mxu0 0
        %1741 = vmatpush1.bf16.xpose.msra.mxu0 0
        %1742 = vmatprep.subr.bf16.mxu0 0
        %1743 = vmatpush1.bf16.xpose.msra.mxu0 0
        %1744 = vmatprep.subr.bf16.mxu0 0
        %1745 = vmatpush1.bf16.xpose.msra.mxu0 0
        %1746 = vmatprep.subr.bf16.mxu0 0
        %1747 = vmatpush1.bf16.xpose.msra.mxu0 0
        %1748 = vmatprep.subr.bf16.mxu0 0
        %1749 = vmatpush1.bf16.xpose.msra.mxu0 0
        %1750 = vmatprep.subr.bf16.mxu0 0
        %1751 = vmatpush1.bf16.xpose.msra.mxu0 0
        %1752 = vmatprep.subr.bf16.mxu0 0
        %1753 = vmatpush1.bf16.xpose.msra.mxu0 0
        %1754 = vmatprep.subr.bf16.mxu0 0
        %1755 = vmatpush1.bf16.xpose.msra.mxu0 0
        %1756 = vmatprep.subr.bf16.mxu0 0
        %1757 = vmatpush1.bf16.xpose.msra.mxu0 0
        %1758 = vmatprep.subr.bf16.mxu0 0
        %1759 = vmatpush1.bf16.xpose.msra.mxu0 0
        %1760 = vmatprep.mubr.bf16.mxu0 0
        %1761 = vmatmul.mubr.bf16.gmra.mrb[0].mxu0 %v1723
        %v1762 = vpop.f32.mrb[0].mxu0
        %v1763 = vadd.f32 0.0, %v1762
        %v1764 = vpop.f32.mrb[0].mxu0
        %v1765 = vpop.f32.mrb[0].mxu0
        %v1766 = vpop.f32.mrb[0].mxu0
        %1767 = vdwg.mxu0
        %1768 = vxpose.xlu0.b32.start [1/16] %v1625, 128
        %1769 = vxpose.xlu0.b32.cont [2/16] 0.0, 128
        %1770 = vxpose.xlu0.b32.cont [3/16] 0.0, 128
        %1771 = vxpose.xlu0.b32.cont [4/16] 0.0, 128
        %1772 = vxpose.xlu0.b32.cont [5/16] 0.0, 128
        %1773 = vxpose.xlu0.b32.cont [6/16] 0.0, 128
        %1774 = vxpose.xlu0.b32.cont [7/16] 0.0, 128
        %1775 = vxpose.xlu0.b32.cont [8/16] 0.0, 128
        %1776 = vxpose.xlu0.b32.cont [9/16] 0.0, 128
        %1777 = vxpose.xlu0.b32.cont [10/16] 0.0, 128
        %1778 = vxpose.xlu0.b32.cont [11/16] 0.0, 128
        %1779 = vxpose.xlu0.b32.cont [12/16] 0.0, 128
        %1780 = vxpose.xlu0.b32.cont [13/16] 0.0, 128
        %1781 = vxpose.xlu0.b32.cont [14/16] 0.0, 128
        %1782 = vxpose.xlu0.b32.cont [15/16] 0.0, 128
        %1783 = vxpose.xlu0.b32.end [16/16] 0.0, 128
        %v1784 = vpop.trf.xlu0
        %v1785 = vpop.trf.xlu0
        %v1786 = vpop.trf.xlu0
        %v1787 = vpop.trf.xlu0
        %v1788 = vpop.trf.xlu0
        %v1789 = vpop.trf.xlu0
        %v1790 = vpop.trf.xlu0
        %v1791 = vpop.trf.xlu0
        %v1792 = vpop.trf.xlu0
        %v1793 = vpop.trf.xlu0
        %v1794 = vpop.trf.xlu0
        %v1795 = vpop.trf.xlu0
        %v1796 = vpop.trf.xlu0
        %v1797 = vpop.trf.xlu0
        %v1798 = vpop.trf.xlu0
        %v1799 = vpop.trf.xlu0
        %1800 = vxpose.xlu0.b32.start [1/16] %v1671, 128
        %1801 = vxpose.xlu0.b32.cont [2/16] 0.0, 128
        %1802 = vxpose.xlu0.b32.cont [3/16] 0.0, 128
        %1803 = vxpose.xlu0.b32.cont [4/16] 0.0, 128
        %1804 = vxpose.xlu0.b32.cont [5/16] 0.0, 128
        %1805 = vxpose.xlu0.b32.cont [6/16] 0.0, 128
        %1806 = vxpose.xlu0.b32.cont [7/16] 0.0, 128
        %1807 = vxpose.xlu0.b32.cont [8/16] 0.0, 128
        %1808 = vxpose.xlu0.b32.cont [9/16] 0.0, 128
        %1809 = vxpose.xlu0.b32.cont [10/16] 0.0, 128
        %1810 = vxpose.xlu0.b32.cont [11/16] 0.0, 128
        %1811 = vxpose.xlu0.b32.cont [12/16] 0.0, 128
        %1812 = vxpose.xlu0.b32.cont [13/16] 0.0, 128
        %1813 = vxpose.xlu0.b32.cont [14/16] 0.0, 128
        %1814 = vxpose.xlu0.b32.cont [15/16] 0.0, 128
        %1815 = vxpose.xlu0.b32.end [16/16] 0.0, 128
        %v1816 = vpop.trf.xlu0
        %v1817 = vpop.trf.xlu0
        %v1818 = vpop.trf.xlu0
        %v1819 = vpop.trf.xlu0
        %v1820 = vpop.trf.xlu0
        %v1821 = vpop.trf.xlu0
        %v1822 = vpop.trf.xlu0
        %v1823 = vpop.trf.xlu0
        %v1824 = vpop.trf.xlu0
        %v1825 = vpop.trf.xlu0
        %v1826 = vpop.trf.xlu0
        %v1827 = vpop.trf.xlu0
        %v1828 = vpop.trf.xlu0
        %v1829 = vpop.trf.xlu0
        %v1830 = vpop.trf.xlu0
        %v1831 = vpop.trf.xlu0
        %1832 = vxpose.xlu0.b32.start [1/16] %v1717, 128
        %1833 = vxpose.xlu0.b32.cont [2/16] 0.0, 128
        %1834 = vxpose.xlu0.b32.cont [3/16] 0.0, 128
        %1835 = vxpose.xlu0.b32.cont [4/16] 0.0, 128
        %1836 = vxpose.xlu0.b32.cont [5/16] 0.0, 128
        %1837 = vxpose.xlu0.b32.cont [6/16] 0.0, 128
        %1838 = vxpose.xlu0.b32.cont [7/16] 0.0, 128
        %1839 = vxpose.xlu0.b32.cont [8/16] 0.0, 128
        %1840 = vxpose.xlu0.b32.cont [9/16] 0.0, 128
        %1841 = vxpose.xlu0.b32.cont [10/16] 0.0, 128
        %1842 = vxpose.xlu0.b32.cont [11/16] 0.0, 128
        %1843 = vxpose.xlu0.b32.cont [12/16] 0.0, 128
        %1844 = vxpose.xlu0.b32.cont [13/16] 0.0, 128
        %1845 = vxpose.xlu0.b32.cont [14/16] 0.0, 128
        %1846 = vxpose.xlu0.b32.cont [15/16] 0.0, 128
        %1847 = vxpose.xlu0.b32.end [16/16] 0.0, 128
        %v1848 = vpop.trf.xlu0
        %v1849 = vpop.trf.xlu0
        %v1850 = vpop.trf.xlu0
        %v1851 = vpop.trf.xlu0
        %v1852 = vpop.trf.xlu0
        %v1853 = vpop.trf.xlu0
        %v1854 = vpop.trf.xlu0
        %v1855 = vpop.trf.xlu0
        %v1856 = vpop.trf.xlu0
        %v1857 = vpop.trf.xlu0
        %v1858 = vpop.trf.xlu0
        %v1859 = vpop.trf.xlu0
        %v1860 = vpop.trf.xlu0
        %v1861 = vpop.trf.xlu0
        %v1862 = vpop.trf.xlu0
        %v1863 = vpop.trf.xlu0
        %1864 = vxpose.xlu0.b32.start [1/16] %v1763, 128
        %1865 = vxpose.xlu0.b32.cont [2/16] 0.0, 128
        %1866 = vxpose.xlu0.b32.cont [3/16] 0.0, 128
        %1867 = vxpose.xlu0.b32.cont [4/16] 0.0, 128
        %1868 = vxpose.xlu0.b32.cont [5/16] 0.0, 128
        %1869 = vxpose.xlu0.b32.cont [6/16] 0.0, 128
        %1870 = vxpose.xlu0.b32.cont [7/16] 0.0, 128
        %1871 = vxpose.xlu0.b32.cont [8/16] 0.0, 128
        %1872 = vxpose.xlu0.b32.cont [9/16] 0.0, 128
        %1873 = vxpose.xlu0.b32.cont [10/16] 0.0, 128
        %1874 = vxpose.xlu0.b32.cont [11/16] 0.0, 128
        %1875 = vxpose.xlu0.b32.cont [12/16] 0.0, 128
        %1876 = vxpose.xlu0.b32.cont [13/16] 0.0, 128
        %1877 = vxpose.xlu0.b32.cont [14/16] 0.0, 128
        %1878 = vxpose.xlu0.b32.cont [15/16] 0.0, 128
        %1879 = vxpose.xlu0.b32.end [16/16] 0.0, 128
        %v1880 = vpop.trf.xlu0
        %v1881 = vpop.trf.xlu0
        %v1882 = vpop.trf.xlu0
        %v1883 = vpop.trf.xlu0
        %v1884 = vpop.trf.xlu0
        %v1885 = vpop.trf.xlu0
        %v1886 = vpop.trf.xlu0
        %v1887 = vpop.trf.xlu0
        %v1888 = vpop.trf.xlu0
        %v1889 = vpop.trf.xlu0
        %v1890 = vpop.trf.xlu0
        %v1891 = vpop.trf.xlu0
        %v1892 = vpop.trf.xlu0
        %v1893 = vpop.trf.xlu0
        %v1894 = vpop.trf.xlu0
        %v1895 = vpop.trf.xlu0
        %v1896 = vcombine.low %v1784, %v1848
        %v1897 = vcombine.high %v1784, %v1848
        %v1899 = vunpack.c.l.s4 1983009808
        %v1900 = vunpack.c.0.s8 %v1899
        %v1901 = vlaneseq
        %v1902 = vshrl.u32 %v1901, 7
        %v1903 = vsub.s32 %v1900, %v1902
        %v1904 = vrot.slane %v1896, %v1903
        %v1906 = vunpack.c.l.s4 1983009808
        %v1907 = vunpack.c.0.s8 %v1906
        %v1908 = vlaneseq
        %v1909 = vshrl.u32 %v1908, 7
        %v1910 = vsub.s32 %v1907, %v1909
        %v1911 = vrot.slane %v1897, %v1910
        %v1912 = vcombine.low %v1816, %v1880
        %v1913 = vcombine.high %v1816, %v1880
        %v1915 = vunpack.c.l.s4 1983009808
        %v1916 = vunpack.c.0.s8 %v1915
        %v1917 = vlaneseq
        %v1918 = vshrl.u32 %v1917, 7
        %v1919 = vsub.s32 %v1916, %v1918
        %v1920 = vrot.slane %v1912, %v1919
        %v1922 = vunpack.c.l.s4 1983009808
        %v1923 = vunpack.c.0.s8 %v1922
        %v1924 = vlaneseq
        %v1925 = vshrl.u32 %v1924, 7
        %v1926 = vsub.s32 %v1923, %v1925
        %v1927 = vrot.slane %v1913, %v1926
        %v1928 = vcombine.low %v1904, %v1920
        %v1929 = vcombine.high %v1904, %v1920
        %v1931 = vunpack.c.l.s4 1934713408
        %v1932 = vunpack.c.0.s8 %v1931
        %v1933 = vlaneseq
        %v1934 = vshrl.u32 %v1933, 7
        %v1935 = vsub.s32 %v1932, %v1934
        %v1936 = vrot.slane %v1928, %v1935
        %v1938 = vunpack.c.l.s4 1934713408
        %v1939 = vunpack.c.0.s8 %v1938
        %v1940 = vlaneseq
        %v1941 = vshrl.u32 %v1940, 7
        %v1942 = vsub.s32 %v1939, %v1941
        %v1943 = vrot.slane %v1929, %v1942
        %v1944 = vcombine.low %v1911, %v1927
        %v1945 = vcombine.high %v1911, %v1927
        %v1947 = vunpack.c.l.s4 1934713408
        %v1948 = vunpack.c.0.s8 %v1947
        %v1949 = vlaneseq
        %v1950 = vshrl.u32 %v1949, 7
        %v1951 = vsub.s32 %v1948, %v1950
        %v1952 = vrot.slane %v1944, %v1951
        %v1954 = vunpack.c.l.s4 1934713408
        %v1955 = vunpack.c.0.s8 %v1954
        %v1956 = vlaneseq
        %v1957 = vshrl.u32 %v1956, 7
        %v1958 = vsub.s32 %v1955, %v1957
        %v1959 = vrot.slane %v1945, %v1958
        %v1960 = vcombine.high %v1936, 0.0
        %v1961 = vcombine.high %v1943, 0.0
        %v1962 = vcombine.high %v1952, 0.0
        %v1963 = vcombine.high %v1959, 0.0
        %v1964 = vcombine.low %v1936, %v1943
        %v1966 = vunpack.c.l.s4 1983009808
        %v1967 = vunpack.c.0.s8 %v1966
        %v1968 = vlaneseq
        %v1969 = vshrl.u32 %v1968, 7
        %v1970 = vsub.s32 %v1967, %v1969
        %v1971 = vrot.slane %v1964, %v1970
        %v1972 = vcombine.low %v1960, %v1961
        %v1974 = vunpack.c.l.s4 1983009808
        %v1975 = vunpack.c.0.s8 %v1974
        %v1976 = vlaneseq
        %v1977 = vshrl.u32 %v1976, 7
        %v1978 = vsub.s32 %v1975, %v1977
        %v1979 = vrot.slane %v1972, %v1978
        %v1980 = vcombine.low %v1952, %v1959
        %v1982 = vunpack.c.l.s4 1983009808
        %v1983 = vunpack.c.0.s8 %v1982
        %v1984 = vlaneseq
        %v1985 = vshrl.u32 %v1984, 7
        %v1986 = vsub.s32 %v1983, %v1985
        %v1987 = vrot.slane %v1980, %v1986
        %v1988 = vcombine.low %v1962, %v1963
        %v1990 = vunpack.c.l.s4 1983009808
        %v1991 = vunpack.c.0.s8 %v1990
        %v1992 = vlaneseq
        %v1993 = vshrl.u32 %v1992, 7
        %v1994 = vsub.s32 %v1991, %v1993
        %v1995 = vrot.slane %v1988, %v1994
        %v1996 = vcombine.low %v1971, %v1979
        %v1997 = vcombine.high %v1971, %v1979
        %v1999 = vunpack.c.l.s4 1934713408
        %v2000 = vunpack.c.0.s8 %v1999
        %v2001 = vlaneseq
        %v2002 = vshrl.u32 %v2001, 7
        %v2003 = vsub.s32 %v2000, %v2002
        %v2004 = vrot.slane %v1996, %v2003
        %v2006 = vunpack.c.l.s4 1934713408
        %v2007 = vunpack.c.0.s8 %v2006
        %v2008 = vlaneseq
        %v2009 = vshrl.u32 %v2008, 7
        %v2010 = vsub.s32 %v2007, %v2009
        %v2011 = vrot.slane %v1997, %v2010
        %v2012 = vcombine.low %v1987, %v1995
        %v2013 = vcombine.high %v1987, %v1995
        %v2015 = vunpack.c.l.s4 1934713408
        %v2016 = vunpack.c.0.s8 %v2015
        %v2017 = vlaneseq
        %v2018 = vshrl.u32 %v2017, 7
        %v2019 = vsub.s32 %v2016, %v2018
        %v2020 = vrot.slane %v2012, %v2019
        %v2022 = vunpack.c.l.s4 1934713408
        %v2023 = vunpack.c.0.s8 %v2022
        %v2024 = vlaneseq
        %v2025 = vshrl.u32 %v2024, 7
        %v2026 = vsub.s32 %v2023, %v2025
        %v2027 = vrot.slane %v2013, %v2026
        %v2028 = vcombine.low %v2004, %v2020
        %v2029 = vcombine.high %v2004, %v2020
        %v2030 = vcombine.low %v2011, %v2027
        %v2031 = vcombine.high %v2011, %v2027
        %2033 = vrot.lane.b32.xlu0 %v2029, 8
        %v2034 = vpop.permute.xlu0 %2033
        %2037 = vrot.lane.b32.xlu0 %v2030, 16
        %v2038 = vpop.permute.xlu0 %2037
        %2041 = vrot.lane.b32.xlu0 %v2031, 24
        %v2042 = vpop.permute.xlu0 %2041
        %v2044 = vsel %vm1268, %v2028, %v2034
        %vm2045 = vcmask 130048
        %v2046 = vsel %vm2045, %v2044, %v2038
        %vm2047 = vcmask 195584
        %v2048 = vsel %vm2047, %v2046, %v2042
        %v2049 = vpack.c.bf16 %v2048, %v2048
        %v2050 = vld [vmem:[%s9] sm:$0xf]
        %v2051 = vld [vmem:[%s9 + $0x4] sm:$0xf]
        %v2052 = vld [vmem:[%s9 + $0x8] sm:$0xf]
        %v2053 = vld [vmem:[%s9 + $0xc] sm:$0xf]
        %v2054 = vld [vmem:[#allocation13] sm:$0x1]
        %v2056 = vlaneseq
        %v2057 = vshrl.u32 %v2056, 7
        %v2058 = vsub.s32 0, %v2057
        %v2059 = vrot.slane %v2054, %v2058
        %v2065 = vunpack.c.l.b16 %v2050
        %v2066 = vunpack.c.l.b16 %v2051
        %v2067 = vunpack.c.l.b16 %v2052
        %v2068 = vunpack.c.l.b16 %v2053
        %v2069 = vpack.c.b16 %v2066, %v2065
        %v2070 = vpack.c.b16 %v2068, %v2067
        %v2074 = vsel %vm990, %v2049, 0
        %2076 = vmatprep.subr.bf16.mxu0 0
        %2077 = vmatpush1.bf16.msra.mxu0 %v2069
        %2078 = vmatprep.subr.bf16.mxu0 0
        %2079 = vmatpush1.bf16.msra.mxu0 %v2070
        %2080 = vmatprep.subr.bf16.mxu0 0
        %2081 = vmatpush1.bf16.msra.mxu0 0
        %2082 = vmatprep.subr.bf16.mxu0 0
        %2083 = vmatpush1.bf16.msra.mxu0 0
        %2084 = vmatprep.subr.bf16.mxu0 0
        %2085 = vmatpush1.bf16.msra.mxu0 0
        %2086 = vmatprep.subr.bf16.mxu0 0
        %2087 = vmatpush1.bf16.msra.mxu0 0
        %2088 = vmatprep.subr.bf16.mxu0 0
        %2089 = vmatpush1.bf16.msra.mxu0 0
        %2090 = vmatprep.subr.bf16.mxu0 0
        %2091 = vmatpush1.bf16.msra.mxu0 0
        %2092 = vmatprep.subr.bf16.mxu0 0
        %2093 = vmatpush1.bf16.msra.mxu0 0
        %2094 = vmatprep.subr.bf16.mxu0 0
        %2095 = vmatpush1.bf16.msra.mxu0 0
        %2096 = vmatprep.subr.bf16.mxu0 0
        %2097 = vmatpush1.bf16.msra.mxu0 0
        %2098 = vmatprep.subr.bf16.mxu0 0
        %2099 = vmatpush1.bf16.msra.mxu0 0
        %2100 = vmatprep.subr.bf16.mxu0 0
        %2101 = vmatpush1.bf16.msra.mxu0 0
        %2102 = vmatprep.subr.bf16.mxu0 0
        %2103 = vmatpush1.bf16.msra.mxu0 0
        %2104 = vmatprep.subr.bf16.mxu0 0
        %2105 = vmatpush1.bf16.msra.mxu0 0
        %2106 = vmatprep.subr.bf16.mxu0 0
        %2107 = vmatpush1.bf16.msra.mxu0 0
        %2108 = vmatprep.mubr.bf16.mxu0 0
        %2109 = vmatmul.mubr.bf16.gmra.mrb[0].mxu0 %v2074
        %v2110 = vpop.f32.mrb[0].mxu0
        %v2111 = vadd.f32 %v2059, %v2110
        %v2112 = vpop.f32.mrb[0].mxu0
        %v2113 = vpop.f32.mrb[0].mxu0
        %v2114 = vpop.f32.mrb[0].mxu0
        %2115 = vdwg.mxu0
        %v2116 = vmul.f32 %v2111, 2.0
        %v2117 = vld [vmem:[#allocation15] sm:$0x1]
        %v2118 = vld [vmem:[#allocation16] sm:$0x1]
        %v2119 = vsel %vm990, %v2116, 0.0
        %2120 = vadd.xlane.f32.xlu0 %v2119
        %v2121 = vpop.xlane.xlu0 %2120
        %v2122 = vrcp.pop 32.0
        %v2123 = vmul.f32 %v2121, %v2122
        %v2124 = vsub.f32 %v2116, %v2123
        %v2125 = vmul.f32 %v2124, %v2124
        %v2126 = vsel %vm990, %v2125, 0.0
        %2127 = vadd.xlane.f32.xlu0 %v2126
        %v2128 = vpop.xlane.xlu0 %2127
        %v2129 = vmul.f32 %v2128, %v2122
        %v2130 = vadd.f32 %v2129, 1e-05
        %v2131 = vrsqrt.pop %v2130
        %v2132 = vmul.f32 %v2124, %v2131
        %v2134 = vlaneseq
        %v2135 = vshrl.u32 %v2134, 7
        %v2136 = vsub.s32 0, %v2135
        %v2137 = vrot.slane %v2117, %v2136
        %v2139 = vmul.f32 %v2132, %v2137
        %v2141 = vlaneseq
        %v2142 = vshrl.u32 %v2141, 7
        %v2143 = vsub.s32 0, %v2142
        %v2144 = vrot.slane %v2118, %v2143
        %v2146 = vadd.f32 %v2139, %v2144
        %v2147 = vpack.c.bf16 %v2146, %v2146
        %v2148 = vld [vmem:[%s15] sm:$0xf]
        %v2149 = vld [vmem:[%s15 + $0x4] sm:$0xf]
        %v2150 = vld [vmem:[%s15 + $0x8] sm:$0xf]
        %v2151 = vld [vmem:[%s15 + $0xc] sm:$0xf]
        %v2152 = vld [vmem:[%s16] sm:$0x1]
        %v2154 = vlaneseq
        %v2155 = vshrl.u32 %v2154, 7
        %v2156 = vsub.s32 0, %v2155
        %v2157 = vrot.slane %v2152, %v2156
        %v2163 = vunpack.c.l.b16 %v2148
        %v2164 = vunpack.c.l.b16 %v2149
        %v2165 = vunpack.c.l.b16 %v2150
        %v2166 = vunpack.c.l.b16 %v2151
        %v2167 = vpack.c.b16 %v2164, %v2163
        %v2168 = vpack.c.b16 %v2166, %v2165
        %v2172 = vsel %vm990, %v2147, 0
        %2174 = vmatprep.subr.bf16.mxu0 0
        %2175 = vmatpush1.bf16.msra.mxu0 %v2167
        %2176 = vmatprep.subr.bf16.mxu0 0
        %2177 = vmatpush1.bf16.msra.mxu0 %v2168
        %2178 = vmatprep.subr.bf16.mxu0 0
        %2179 = vmatpush1.bf16.msra.mxu0 0
        %2180 = vmatprep.subr.bf16.mxu0 0
        %2181 = vmatpush1.bf16.msra.mxu0 0
        %2182 = vmatprep.subr.bf16.mxu0 0
        %2183 = vmatpush1.bf16.msra.mxu0 0
        %2184 = vmatprep.subr.bf16.mxu0 0
        %2185 = vmatpush1.bf16.msra.mxu0 0
        %2186 = vmatprep.subr.bf16.mxu0 0
        %2187 = vmatpush1.bf16.msra.mxu0 0
        %2188 = vmatprep.subr.bf16.mxu0 0
        %2189 = vmatpush1.bf16.msra.mxu0 0
        %2190 = vmatprep.subr.bf16.mxu0 0
        %2191 = vmatpush1.bf16.msra.mxu0 0
        %2192 = vmatprep.subr.bf16.mxu0 0
        %2193 = vmatpush1.bf16.msra.mxu0 0
        %2194 = vmatprep.subr.bf16.mxu0 0
        %2195 = vmatpush1.bf16.msra.mxu0 0
        %2196 = vmatprep.subr.bf16.mxu0 0
        %2197 = vmatpush1.bf16.msra.mxu0 0
        %2198 = vmatprep.subr.bf16.mxu0 0
        %2199 = vmatpush1.bf16.msra.mxu0 0
        %2200 = vmatprep.subr.bf16.mxu0 0
        %2201 = vmatpush1.bf16.msra.mxu0 0
        %2202 = vmatprep.subr.bf16.mxu0 0
        %2203 = vmatpush1.bf16.msra.mxu0 0
        %2204 = vmatprep.subr.bf16.mxu0 0
        %2205 = vmatpush1.bf16.msra.mxu0 0
        %2206 = vmatprep.mubr.bf16.mxu0 0
        %2207 = vmatmul.mubr.bf16.gmra.mrb[0].mxu0 %v2172
        %v2208 = vpop.f32.mrb[0].mxu0
        %v2209 = vadd.f32 %v2157, %v2208
        %v2210 = vpop.f32.mrb[0].mxu0
        %v2211 = vpop.f32.mrb[0].mxu0
        %v2212 = vpop.f32.mrb[0].mxu0
        %2213 = vdwg.mxu0
        %v2214 = vmax.f32 %v2209, 0.0
        %v2215 = vpack.c.bf16 %v2214, %v2214
        %v2216 = vld [vmem:[%s17] sm:$0xf]
        %v2217 = vld [vmem:[%s17 + $0x4] sm:$0xf]
        %v2218 = vld [vmem:[%s17 + $0x8] sm:$0xf]
        %v2219 = vld [vmem:[%s17 + $0xc] sm:$0xf]
        %v2220 = vld [vmem:[%s17 + $0x10] sm:$0xf]
        %v2221 = vld [vmem:[%s17 + $0x14] sm:$0xf]
        %v2222 = vld [vmem:[%s17 + $0x18] sm:$0xf]
        %v2223 = vld [vmem:[%s17 + $0x1c] sm:$0xf]
        %v2224 = vld [vmem:[%s18] sm:$0x1]
        %v2226 = vlaneseq
        %v2227 = vshrl.u32 %v2226, 7
        %v2228 = vsub.s32 0, %v2227
        %v2229 = vrot.slane %v2224, %v2228
        %v2239 = vunpack.c.l.b16 %v2216
        %v2240 = vunpack.c.l.b16 %v2217
        %v2241 = vunpack.c.l.b16 %v2218
        %v2242 = vunpack.c.l.b16 %v2219
        %v2243 = vunpack.c.l.b16 %v2220
        %v2244 = vunpack.c.l.b16 %v2221
        %v2245 = vunpack.c.l.b16 %v2222
        %v2246 = vunpack.c.l.b16 %v2223
        %v2247 = vpack.c.b16 %v2240, %v2239
        %v2248 = vpack.c.b16 %v2242, %v2241
        %v2249 = vpack.c.b16 %v2244, %v2243
        %v2250 = vpack.c.b16 %v2246, %v2245
        %vm2255 = vcmask 523264
        %v2257 = vsel %vm2255, %v2215, 0
        %2259 = vmatprep.subr.bf16.mxu0 0
        %2260 = vmatpush1.bf16.msra.mxu0 %v2247
        %2261 = vmatprep.subr.bf16.mxu0 0
        %2262 = vmatpush1.bf16.msra.mxu0 %v2248
        %2263 = vmatprep.subr.bf16.mxu0 0
        %2264 = vmatpush1.bf16.msra.mxu0 %v2249
        %2265 = vmatprep.subr.bf16.mxu0 0
        %2266 = vmatpush1.bf16.msra.mxu0 %v2250
        %2267 = vmatprep.subr.bf16.mxu0 0
        %2268 = vmatpush1.bf16.msra.mxu0 0
        %2269 = vmatprep.subr.bf16.mxu0 0
        %2270 = vmatpush1.bf16.msra.mxu0 0
        %2271 = vmatprep.subr.bf16.mxu0 0
        %2272 = vmatpush1.bf16.msra.mxu0 0
        %2273 = vmatprep.subr.bf16.mxu0 0
        %2274 = vmatpush1.bf16.msra.mxu0 0
        %2275 = vmatprep.subr.bf16.mxu0 0
        %2276 = vmatpush1.bf16.msra.mxu0 0
        %2277 = vmatprep.subr.bf16.mxu0 0
        %2278 = vmatpush1.bf16.msra.mxu0 0
        %2279 = vmatprep.subr.bf16.mxu0 0
        %2280 = vmatpush1.bf16.msra.mxu0 0
        %2281 = vmatprep.subr.bf16.mxu0 0
        %2282 = vmatpush1.bf16.msra.mxu0 0
        %2283 = vmatprep.subr.bf16.mxu0 0
        %2284 = vmatpush1.bf16.msra.mxu0 0
        %2285 = vmatprep.subr.bf16.mxu0 0
        %2286 = vmatpush1.bf16.msra.mxu0 0
        %2287 = vmatprep.subr.bf16.mxu0 0
        %2288 = vmatpush1.bf16.msra.mxu0 0
        %2289 = vmatprep.subr.bf16.mxu0 0
        %2290 = vmatpush1.bf16.msra.mxu0 0
        %2291 = vmatprep.mubr.bf16.mxu0 0
        %2292 = vmatmul.mubr.bf16.gmra.mrb[0].mxu0 %v2257
        %v2293 = vpop.f32.mrb[0].mxu0
        %v2294 = vadd.f32 %v2229, %v2293
        %v2295 = vpop.f32.mrb[0].mxu0
        %v2296 = vpop.f32.mrb[0].mxu0
        %v2297 = vpop.f32.mrb[0].mxu0
        %2298 = vdwg.mxu0
        %v2299 = vadd.f32 %v2146, %v2294
        %v2300 = vld [vmem:[#allocation18] sm:$0x1]
        %v2301 = vld [vmem:[%s14] sm:$0x1]
        %v2302 = vsel %vm990, %v2299, 0.0
        %2303 = vadd.xlane.f32.xlu0 %v2302
        %v2304 = vpop.xlane.xlu0 %2303
        %v2305 = vmul.f32 %v2304, %v2122
        %v2306 = vsub.f32 %v2299, %v2305
        %v2307 = vmul.f32 %v2306, %v2306
        %v2308 = vsel %vm990, %v2307, 0.0
        %2309 = vadd.xlane.f32.xlu0 %v2308
        %v2310 = vpop.xlane.xlu0 %2309
        %v2311 = vmul.f32 %v2310, %v2122
        %v2312 = vadd.f32 %v2311, 1e-05
        %v2313 = vrsqrt.pop %v2312
        %v2314 = vmul.f32 %v2306, %v2313
        %v2316 = vlaneseq
        %v2317 = vshrl.u32 %v2316, 7
        %v2318 = vsub.s32 0, %v2317
        %v2319 = vrot.slane %v2300, %v2318
        %v2321 = vmul.f32 %v2314, %v2319
        %v2323 = vlaneseq
        %v2324 = vshrl.u32 %v2323, 7
        %v2325 = vsub.s32 0, %v2324
        %v2326 = vrot.slane %v2301, %v2325
        %v2328 = vadd.f32 %v2321, %v2326
        %2329 = vst.msk [vmem:[%s813] sm:$0xff] %vm990, %v2328
        %s2330 = sand.u32 %s485, 1
        %s2331 = scalar_lea.sflag [#allocation6], %s2330
        %s2332 = sand.u32 %s485, 1
        %s2333 = smul.addr %s2332, 8
        %s2334 = scalar_lea.vmem [#allocation19], %s2333
        %s2335 = sand.u32 %s513, 1
        %s2336 = scalar_lea.sflag [#allocation21], %s2335
        %s2337 = sand.u32 %s513, 1
        %s2338 = smul.addr %s2337, 32
        %s2339 = scalar_lea.vmem [#allocation20], %s2338
        // Predicated region
        $region137: #{tpu_custom_call.1} parent=95 // pred_check
          %p2340 = pneg %p495
        $region138: #{tpu_custom_call.1} parent=95 // pred_check_branch
          %2342 = sbr.rel (%p2340) target = $region140
        $region139: #{tpu_custom_call.1} parent=95 // pred_region
          %s2344 = ssub.s32 128, 128
          %2345 = vsyncadd %s2331, %s2344
          %s2346 = sadd.s32 %s52, %s51
          %s2347 = smul.addr %s2346, 128
          %s2348 = scalar_lea.hbm %s19, %s2347
          %s2350 = sshll.u32 %s2334, 4
          %s2351 = int_to_ptr.vmem [resolvable:$true] %s2350
          %2353 = dma.vmem_to_hbm [thread:$0]  %s2351, 128, %s2348, %s2331
        $region140: #{tpu_custom_call.1} parent=95 // pred_fallthru
          _
        // Predicated region
        $region141: #{tpu_custom_call.1} parent=95 // pred_check
          %p2354 = pneg %p523
        $region142: #{tpu_custom_call.1} parent=95 // pred_check_branch
          %2356 = sbr.rel (%p2354) target = $region144
        $region143: #{tpu_custom_call.1} parent=95 // pred_region
          %s2358 = ssub.s32 512, 512
          %2359 = vsyncadd %s2336, %s2358
          %s2360 = smul.addr %s51, 4
          %s2361 = sadd.s32 %s52, %s2360
          %s2362 = smul.addr %s2361, 128
          %s2363 = scalar_lea.hbm %s20, %s2362
          %s2364 = sshll.u32 %s2339, 4
          %s2365 = int_to_ptr.vmem [resolvable:$true] %s2364
          %2370 = dma.vmem_to_hbm [thread:$0]  %s2365, 512, %s2363, %s2336, 128, 128, 8
        $region144: #{tpu_custom_call.1} parent=95 // pred_fallthru
          _
      $region96: #{tpu_custom_call.1} parent=5 // pred_fallthru
        _
      %p2371 = scmp.le.s32.totalorder 2, %s42
      // Predicated region
      $region145: #{tpu_custom_call.1} parent=5 // pred_check
        %p2372 = pneg %p2371
      $region146: #{tpu_custom_call.1} parent=5 // pred_check_branch
        %2374 = sbr.rel (%p2372) target = $region148
      $region147: #{tpu_custom_call.1} parent=5 // pred_region
        %s2375 = ssub.s32 %s42, 2
        // Predicated region
        $region149: #{tpu_custom_call.1} parent=147 // pred_check
          %p2376 = pneg %p501
        $region150: #{tpu_custom_call.1} parent=147 // pred_check_branch
          %2378 = sbr.rel (%p2376) target = $region152
        $region151: #{tpu_custom_call.1} parent=147 // pred_region
          %s2379 = sand.u32 %s486, 1
          %s2380 = scalar_lea.sflag [#allocation6], %s2379
          %s2381 = sand.u32 %s486, 1
          %s2382 = smul.addr %s2381, 8
          %s2383 = scalar_lea.vmem [#allocation19], %s2382
          %2384 = dma.done %s2380, 128
        $region152: #{tpu_custom_call.1} parent=147 // pred_fallthru
          _
        // Predicated region
        $region153: #{tpu_custom_call.1} parent=147 // pred_check
          %p2385 = pneg %p529
        $region154: #{tpu_custom_call.1} parent=147 // pred_check_branch
          %2387 = sbr.rel (%p2385) target = $region156
        $region155: #{tpu_custom_call.1} parent=147 // pred_region
          %s2388 = sand.u32 %s514, 1
          %s2389 = scalar_lea.sflag [#allocation21], %s2388
          %s2390 = sand.u32 %s514, 1
          %s2391 = smul.addr %s2390, 32
          %s2392 = scalar_lea.vmem [#allocation20], %s2391
          %2393 = dma.done %s2389, 512
        $region156: #{tpu_custom_call.1} parent=147 // pred_fallthru
          _
      $region148: #{tpu_custom_call.1} parent=5 // pred_fallthru
        _
    $region6: #{tpu_custom_call.1} parent=1 // loop_footer
      %s46 = sadd.s32 1, %s42
    $region7: #{tpu_custom_call.1} parent=1 // loop_footer_branch
      %41 = sbr.rel target = $region3
    $region8: #{tpu_custom_call.1} parent=1 // loop_exit
      _
    %2394 = vsyncpa [#allocation5], 1
    %s2395 = scalar_lea.sflag [#allocation5], 1
    %2396 = vsyncpa %s2395, 1
    %2397 = vsyncpa [#allocation8], 1
    %s2398 = scalar_lea.sflag [#allocation8], 1
    %2399 = vsyncpa %s2398, 1
    %2400 = vsyncpa [#allocation11], 1
    %2401 = vsyncpa [#allocation14], 1
    %2402 = vsyncpa [#allocation17], 1
    %2403 = vsyncpa [#allocation6], 1
    %s2404 = scalar_lea.sflag [#allocation6], 1
    %2405 = vsyncpa %s2404, 1
    %2406 = vsyncpa [#allocation21], 1
    %s2407 = scalar_lea.sflag [#allocation21], 1
    %2408 = vsyncpa %s2407, 1

</llo_original>
